<compile_context>
chip_gen: v7x
topology: tpu7x:2x2x1
jax: 0.10.0
libtpu: 0.0.40
codegen_flags: <defaults>
</compile_context>

<pallas_src>
import functools

import jax
import jax.numpy as jnp
from jax import lax
from jax.experimental import pallas as pl
from jax.experimental.pallas import tpu as pltpu


_MIB = 1024 * 1024
_LANE = 128


def _round_up(n, m):
    return ((n + m - 1) // m) * m


def _vmem_budget_bytes():
    """Scoped-VMEM budget derived from the attached device (~75% of physical VMEM)."""
    try:
        cap = int(pltpu.get_tpu_info().vmem_capacity_bytes)
        if cap <= 0:
            raise ValueError(cap)
    except Exception:
        cap = 64 * _MIB            # conservative fallback (v7x per-TensorCore VMEM)
    return (cap * 3) // 4          # 96 MiB on v5e/v6e (128 MiB), 48 MiB on v7x (64 MiB)


def _vec_buffer_bytes(n_vox):
    # Resident CG state, each stored (1, n_vox): x output block (x2 buffers), x0 input block
    # (x2), r, p, q (f32) + p_bf16 + misc; every (1, N) buffer occupies a full 8-sublane tile.
    per_buf = 8 * 4 * _round_up(n_vox, _LANE)
    return 9 * per_buf


def _sw_block_bytes(block_pix):
    # slices + weights (1, block_pix) f32 input blocks, double-buffered.
    return 2 * 2 * 8 * 4 * _round_up(block_pix, _LANE)


def _plan(n_pix, n_vox, pix_block=None):
    """Decide resident-vs-streamed operator layout and the pixel-row block size."""
    budget = _vmem_budget_bytes()
    a_row = 2 * _round_up(n_vox, _LANE)          # bf16 bytes per A row (lane padded)
    vec = _vec_buffer_bytes(n_vox)
    slack = 2 * _MIB                             # Mosaic internal scratch / misc headroom

    if pix_block is not None:
        tp = _round_up(max(int(pix_block), 256), 256)   # 256-aligned: MXU K dim of the adjoint
        if tp < n_pix:
            return dict(resident=False, pix_block=tp,
                        n_pix_pad=_round_up(n_pix, tp), vmem_limit=budget)
        return dict(resident=True, pix_block=n_pix, n_pix_pad=n_pix, vmem_limit=budget)

    resident_bytes = _round_up(n_pix, 16) * a_row + vec + _sw_block_bytes(n_pix) + slack
    if resident_bytes <= budget:
        # whole bf16 operator stays in a single-buffered VMEM scratch: one HBM pass total.
        return dict(resident=True, pix_block=n_pix, n_pix_pad=n_pix, vmem_limit=budget)

    # streamed: largest 256-aligned row block so two in-flight blocks + CG state fit budget.
    stream_target = 12 * _MIB if budget >= 72 * _MIB else 5 * _MIB
    tp = (stream_target // a_row) // 256 * 256
    fit_rows = (budget - vec - slack) // (2 * a_row) if budget > vec + slack else 0
    fit_tp = (fit_rows // 256) * 256
    if fit_tp >= 256:
        tp = min(tp, fit_tp)
    tp = max(256, int(tp))
    tp = min(tp, _round_up(n_pix, 256))
    return dict(resident=False, pix_block=int(tp),
                n_pix_pad=_round_up(n_pix, int(tp)), vmem_limit=budget)


# --------------------------------------------------------------------------------------
# Pallas kernel: one grid step = (CG phase, pixel-row block of A).
#   phase 0        : fused residual accumulation r0 = At(w*(s - A x0)) over row blocks;
#                    at the last block set p0 = r0, rr = <r0, r0>.
#   phase k (1..n) : accumulate q = AtA(p); at the last block do the (masked, NaN-guarded)
#                    CG update of x, r, p, rr.
#   last grid step : optional in-place ReLU on the VMEM-resident output x.
# --------------------------------------------------------------------------------------
def _srr_cg_kernel(A_ref, s_ref, w_ref, x0_ref,        # inputs
                   x_ref,                               # output (resident accumulator = x)
                   *scratch, resident: bool, tol: float, output_relu: bool):
    if resident:
        a_vmem, a_sem, r_ref, p_ref, pbf_ref, q_ref, rr_ref = scratch
    else:
        r_ref, p_ref, pbf_ref, q_ref, rr_ref = scratch

    phase = pl.program_id(0)              # 0 = setup sweep, 1..n_iter = CG sweeps
    blk = pl.program_id(1)                # pixel-row block within a sweep
    last_blk = pl.num_programs(1) - 1
    last_phase = pl.num_programs(0) - 1

    # ---- one-time init (first grid step) ----
    @pl.when((phase == 0) & (blk == 0))
    def _init():
        if resident:
            # Copy the whole bf16 operator HBM -> VMEM once (single-buffered residency).
            cp = pltpu.make_async_copy(A_ref, a_vmem, a_sem)
            cp.start()
            cp.wait()
        x0 = x0_ref[...]
        x_ref[...] = x0
        pbf_ref[...] = x0.astype(jnp.bfloat16)     # setup-sweep matvec operand is x0

    # ---- start of every sweep: clear the adjoint accumulator ----
    @pl.when(blk == 0)
    def _clear_acc():
        q_ref[...] = jnp.zeros_like(q_ref)

    # ---- fused streamed matvec on this row block (single pass over A per sweep) ----
    A_blk = a_vmem[...] if resident else A_ref[...]          # (TP, N_vox) bf16
    w_blk = w_ref[...]                                       # (1, TP)     f32
    y = lax.dot_general(pbf_ref[...], A_blk, (((1,), (1,)), ((), ())),
                        preferred_element_type=jnp.float32)  # y = v @ A_blk^T : (1, TP) f32
    # setup sweep accumulates the fused residual  r0 += (w*(s - A x0)) @ A_blk
    # CG sweeps accumulate                         q += (w*(A p))      @ A_blk
    g0 = jnp.where(phase == 0, 1.0, 0.0)                     # scalar gate (no bool broadcast)
    lhs = (w_blk * (g0 * s_ref[...] + (1.0 - 2.0 * g0) * y)).astype(jnp.bfloat16)
    q_ref[...] += lax.dot_general(lhs, A_blk, (((1,), (0,)), ((), ())),
                                  preferred_element_type=jnp.float32)

    # ---- end of the setup sweep: r0 = b - AtA(x0), p0 = r0 ----
    @pl.when((phase == 0) & (blk == last_blk))
    def _finish_setup():
        r0 = q_ref[...]
        r_ref[...] = r0
        p_ref[...] = r0
        pbf_ref[...] = r0.astype(jnp.bfloat16)
        rr_ref[...] = jnp.sum(r0 * r0, keepdims=True)        # (1, 1)

    # ---- end of a CG sweep: masked, NaN-guarded update ----
    @pl.when((phase > 0) & (blk == last_blk))
    def _cg_update():
        rr = rr_ref[...]                                     # (1, 1)
        p = p_ref[...]
        q = q_ref[...]
        act = rr > tol                                       # frozen rr <= tol <=> converged
        pq = jnp.sum(p * q, keepdims=True)
        alpha = jnp.where(jnp.logical_and(act, pq != 0.0), rr / pq, 0.0)
        x_new = x_ref[...] + alpha * p
        r_new = r_ref[...] - alpha * q
        rr_new = jnp.sum(r_new * r_new, keepdims=True)
        cont = jnp.logical_and(act, rr_new > tol)
        beta = jnp.where(jnp.logical_and(cont, rr != 0.0), rr_new / rr, 0.0)
        p_new = jnp.where(cont, r_new + beta * p, p)
        x_ref[...] = x_new
        r_ref[...] = r_new
        p_ref[...] = p_new
        pbf_ref[...] = p_new.astype(jnp.bfloat16)            # bf16 LHS cast once per sweep
        rr_ref[...] = jnp.where(act, rr_new, rr)

    # ---- last grid step: optional in-place ReLU on the output volume ----
    if output_relu:
        @pl.when((phase == last_phase) & (blk == last_blk))
        def _relu():
            x_ref[...] = jnp.maximum(x_ref[...], 0.0)


def srr_cg_pallas(A_bf16, s_flat, w_flat, x0_flat, *, n_iter, tol, output_relu,
                  pix_block, resident, vmem_limit):
    n_pix_pad, n_vox = A_bf16.shape

    if resident:
        nb = 1
        a_spec = pl.BlockSpec(memory_space=pl.ANY)           # raw HBM ref; DMA'd once
        sw_block = n_pix_pad
        sw_map = lambda it, j: (0, 0)
        op_scratch = [pltpu.VMEM((n_pix_pad, n_vox), jnp.bfloat16),   # resident A
                      pltpu.SemaphoreType.DMA]
    else:
        assert n_pix_pad % pix_block == 0
        nb = n_pix_pad // pix_block
        a_spec = pl.BlockSpec((pix_block, n_vox), lambda it, j: (j, 0))  # streamed row block
        sw_block = pix_block
        sw_map = lambda it, j: (0, j)
        op_scratch = []

    scratch = op_scratch + [
        pltpu.VMEM((1, n_vox), jnp.float32),    # r
        pltpu.VMEM((1, n_vox), jnp.float32),    # p (CG direction)
        pltpu.VMEM((1, n_vox), jnp.bfloat16),   # p_bf16 (matvec LHS, written once per sweep)
        pltpu.VMEM((1, n_vox), jnp.float32),    # q (adjoint accumulator)
        pltpu.VMEM((1, 1), jnp.float32),        # <r, r>
    ]

    kernel = functools.partial(_srr_cg_kernel, resident=bool(resident),
                               tol=float(tol), output_relu=bool(output_relu))

    return pl.pallas_call(
        kernel,
        out_shape=jax.ShapeDtypeStruct((1, n_vox), jnp.float32),
        grid=(n_iter + 1, nb),
        in_specs=[
            a_spec,
            pl.BlockSpec((1, sw_block), sw_map),                 # slices
            pl.BlockSpec((1, sw_block), sw_map),                 # per-pixel weights p
            pl.BlockSpec((1, n_vox), lambda it, j: (0, 0)),      # x0 (resident)
        ],
        out_specs=pl.BlockSpec((1, n_vox), lambda it, j: (0, 0)),  # x (resident accumulator)
        scratch_shapes=scratch,
        input_output_aliases={3: 0},           # reuse the x0 HBM buffer for the output
        compiler_params=pltpu.CompilerParams(
            dimension_semantics=("arbitrary", "arbitrary"),
            vmem_limit_bytes=int(vmem_limit),
        ),
    )(A_bf16, s_flat, w_flat, x0_flat)


# --------------------------------------------------------------------------------------
# Plain-JAX glue: dense slice-acquisition operator (trilinear * PSF approximation).
# TODO(synk): approximation of the nesvor CUDA `slice_acquisition` coordinate/PSF
#             convention; the adjoint is the exact transpose, so CG semantics hold.
# --------------------------------------------------------------------------------------
def axis_angle_to_matrix(aa):
    theta = jnp.sqrt(jnp.sum(aa * aa, axis=-1, keepdims=True)) + 1e-12
    k = aa / theta
    kx, ky, kz = k[..., 0], k[..., 1], k[..., 2]
    zero = jnp.zeros_like(kx)
    K = jnp.stack([
        jnp.stack([zero, -kz, ky], -1),
        jnp.stack([kz, zero, -kx], -1),
        jnp.stack([-ky, kx, zero], -1)], -2)
    th = theta[..., None]
    return jnp.eye(3) + jnp.sin(th) * K + (1.0 - jnp.cos(th)) * (K @ K)


def gaussian_psf(shape=(3, 3, 3), sigma=(0.8, 0.8, 0.8)):
    z, y, x = jnp.meshgrid(
        *[jnp.arange(s, dtype=jnp.float32) - (s - 1) / 2.0 for s in shape],
        indexing="ij")
    g = jnp.exp(-0.5 * ((z / sigma[0]) ** 2 + (y / sigma[1]) ** 2 + (x / sigma[2]) ** 2))
    return g / jnp.sum(g)


def build_acquisition_matrix(transforms, psf, slice_shape, vol_shape, res_ratio):
    """Dense A[N_pix, N_vox]: slice pixel = sum_psf w * trilinear(volume, T(pix + off))."""
    n_slices = transforms.shape[0]
    D, H, W = vol_shape
    Hs, Ws = slice_shape
    pd, ph, pwd = psf.shape

    iy, ix = jnp.meshgrid(jnp.arange(Hs, dtype=jnp.float32),
                          jnp.arange(Ws, dtype=jnp.float32), indexing="ij")
    sx = (ix - (Ws - 1) / 2.0) * res_ratio
    sy = (iy - (Hs - 1) / 2.0) * res_ratio
    sz = jnp.zeros_like(sx)
    pix = jnp.stack([sx, sy, sz], -1).reshape(-1, 3)                 # (M, 3)

    oz, oy, ox = jnp.meshgrid(
        jnp.arange(pd, dtype=jnp.float32) - (pd - 1) / 2.0,
        jnp.arange(ph, dtype=jnp.float32) - (ph - 1) / 2.0,
        jnp.arange(pwd, dtype=jnp.float32) - (pwd - 1) / 2.0,
        indexing="ij")
    offs = jnp.stack([ox, oy, oz], -1).reshape(-1, 3)                # (P, 3)
    wpsf = psf.reshape(-1)                                           # (P,)

    R = transforms[:, :, :3]                                         # (n, 3, 3)
    t = transforms[:, :, 3]                                          # (n, 3)

    M = Hs * Ws
    P = offs.shape[0]
    pts = pix[None, :, None, :] + offs[None, None, :, :]             # (1, M, P, 3)
    pts = jnp.broadcast_to(pts, (n_slices, M, P, 3))
    vol_pts = jnp.einsum("nij,nmpj->nmpi", R, pts) + t[:, None, None, :]
    vx = vol_pts[..., 0] + (W - 1) / 2.0
    vy = vol_pts[..., 1] + (H - 1) / 2.0
    vz = vol_pts[..., 2] + (D - 1) / 2.0

    x0f = jnp.floor(vx); y0f = jnp.floor(vy); z0f = jnp.floor(vz)
    fx = vx - x0f; fy = vy - y0f; fz = vz - z0f
    x0i = x0f.astype(jnp.int32); y0i = y0f.astype(jnp.int32); z0i = z0f.astype(jnp.int32)

    pix_id = jnp.arange(n_slices * M, dtype=jnp.int32).reshape(n_slices, M)
    row = jnp.broadcast_to(pix_id[:, :, None], (n_slices, M, P))

    N_pix = n_slices * M
    N_vox = D * H * W
    A = jnp.zeros((N_pix, N_vox), jnp.float32)
    for dz in (0, 1):
        for dy in (0, 1):
            for dx in (0, 1):
                xi = x0i + dx; yi = y0i + dy; zi = z0i + dz
                wx = fx if dx else (1.0 - fx)
                wy = fy if dy else (1.0 - fy)
                wz = fz if dz else (1.0 - fz)
                w = wx * wy * wz * wpsf[None, None, :]
                valid = ((xi >= 0) & (xi < W) & (yi >= 0) & (yi < H) &
                         (zi >= 0) & (zi < D))
                w = jnp.where(valid, w, 0.0)
                xic = jnp.clip(xi, 0, W - 1)
                yic = jnp.clip(yi, 0, H - 1)
                zic = jnp.clip(zi, 0, D - 1)
                col = zic * (H * W) + yic * W + xic
                A = A.at[row.reshape(-1), col.reshape(-1)].add(w.reshape(-1))
    return A


def _prepare_operands(transforms, slices, volume, params, p=None,
                      slices_mask=None, vol_mask=None):
    D, H, W = params["volume_shape"]
    Hs, Ws = params["slice_shape"]
    res_ratio = params["res_s"] / params["res_r"]
    A = build_acquisition_matrix(transforms, params["psf"], (Hs, Ws), (D, H, W), res_ratio)
    if slices_mask is not None:
        A = A * slices_mask.reshape(-1, 1).astype(A.dtype)
    if vol_mask is not None:
        A = A * vol_mask.reshape(1, -1).astype(A.dtype)
    n_slices = slices.shape[0]
    n_pix = n_slices * Hs * Ws
    n_vox = D * H * W
    s_flat = slices.reshape(1, n_pix).astype(jnp.float32)
    w_flat = (p.reshape(1, n_pix).astype(jnp.float32) if p is not None
              else jnp.ones((1, n_pix), jnp.float32))
    x0_flat = volume.reshape(1, n_vox).astype(jnp.float32)
    return A, s_flat, w_flat, x0_flat


# --------------------------------------------------------------------------------------
# Module wrapper mirroring nesvor.svort.models.SRR.forward
# --------------------------------------------------------------------------------------
class SRR:
    def __init__(self, n_iter: int = 10, tol: float = 0.0, output_relu: bool = True,
                 pix_block=None):
        self.n_iter = n_iter
        self.tol = tol
        self.output_relu = output_relu
        self.pix_block = pix_block      # None -> auto (resident if it fits, else streamed)

    def __call__(self, transforms, slices, volume, params, p=None,
                 slices_mask=None, vol_mask=None):
        A, s_flat, w_flat, x0_flat = _prepare_operands(
            transforms, slices, volume, params, p, slices_mask, vol_mask)
        n_pix, n_vox = A.shape

        plan = _plan(n_pix, n_vox, self.pix_block)
        if plan["n_pix_pad"] != n_pix:
            pad = plan["n_pix_pad"] - n_pix      # zero A rows / zero weights: no effect
            A = jnp.pad(A, ((0, pad), (0, 0)))
            s_flat = jnp.pad(s_flat, ((0, 0), (0, pad)))
            w_flat = jnp.pad(w_flat, ((0, 0), (0, pad)))

        out = srr_cg_pallas(A.astype(jnp.bfloat16), s_flat, w_flat, x0_flat,
                            n_iter=self.n_iter, tol=self.tol,
                            output_relu=self.output_relu,
                            pix_block=plan["pix_block"], resident=plan["resident"],
                            vmem_limit=plan["vmem_limit"])
        return out.reshape(volume.shape)


# --------------------------------------------------------------------------------------
# Pure-JAX reference with identical bf16-operator (fused-residual) math, for validation.
# --------------------------------------------------------------------------------------
def _srr_cg_reference(A_bf16, s, w, x0, n_iter, tol, output_relu):
    def a_fwd(vb):
        return lax.dot_general(vb, A_bf16, (((1,), (1,)), ((), ())),
                               preferred_element_type=jnp.float32)

    def a_adj(y):
        return lax.dot_general(y.astype(jnp.bfloat16), A_bf16, (((1,), (0,)), ((), ())),
                               preferred_element_type=jnp.float32)

    x = x0
    pbf = x0.astype(jnp.bfloat16)
    r = a_adj(w * (s - a_fwd(pbf)))          # fused residual r0 = At(w*(s - A x0))
    p = r
    pbf = r.astype(jnp.bfloat16)
    rr = jnp.sum(r * r, keepdims=True)
    for _ in range(n_iter):
        q = a_adj(w * a_fwd(pbf))
        act = rr > tol
        pq = jnp.sum(p * q, keepdims=True)
        alpha = jnp.where(jnp.logical_and(act, pq != 0.0), rr / pq, 0.0)
        x = x + alpha * p
        r = r - alpha * q
        rr_new = jnp.sum(r * r, keepdims=True)
        cont = jnp.logical_and(act, rr_new > tol)
        beta = jnp.where(jnp.logical_and(cont, rr != 0.0), rr_new / rr, 0.0)
        p = jnp.where(cont, r + beta * p, p)
        pbf = p.astype(jnp.bfloat16)
        rr = jnp.where(act, rr_new, rr)
    return jnp.maximum(x, 0.0) if output_relu else x


# --------------------------------------------------------------------------------------
if __name__ == "__main__":
    key = jax.random.PRNGKey(0)
    k1, k2, k3, k4 = jax.random.split(key, 4)

    n_slices = 10
    D = H = W = 8              # volume 8x8x8  -> N_vox = 512
    Hs = Ws = 8                # slices 8x8    -> N_pix = 640
    res_s, res_r = 1.0, 1.0

    # deterministic rigid transforms: small rotations + z offsets covering the volume
    aa = jax.random.normal(k1, (n_slices, 3), jnp.float32) * 0.05
    R = axis_angle_to_matrix(aa)
    tz = jnp.linspace(-3.0, 3.0, n_slices)
    t = jnp.stack([jnp.zeros(n_slices), jnp.zeros(n_slices), tz], -1)
    transforms = jnp.concatenate([R, t[..., None]], axis=-1)       # (n_slices, 3, 4)

    slices = jax.random.uniform(k2, (n_slices, 1, Hs, Ws), jnp.float32)
    volume0 = jax.random.uniform(k3, (1, 1, D, H, W), jnp.float32) * 0.1
    p = jax.random.uniform(k4, (n_slices, 1, Hs, Ws), jnp.float32,
                           minval=0.5, maxval=1.5)

    params = {
        "psf": gaussian_psf((3, 3, 3), (0.8, 0.8, 0.8)),
        "slice_shape": (Hs, Ws),
        "volume_shape": (D, H, W),
        "res_s": res_s,
        "res_r": res_r,
    }

    # (a) auto plan: whole bf16 operator fits -> single-buffered VMEM-resident A (1 HBM pass)
    srr_resident = SRR(n_iter=10, tol=0.0, output_relu=True)
    # (b) forced streaming: 256-pixel row blocks (N_pix padded 640 -> 768, 3 blocks)
    srr_streamed = SRR(n_iter=10, tol=0.0, output_relu=True, pix_block=256)

    out_res = jax.block_until_ready(srr_resident(transforms, slices, volume0, params, p=p))
    out_str = jax.block_until_ready(srr_streamed(transforms, slices, volume0, params, p=p))

    # reference with identical bf16-operator math
    A, s_flat, w_flat, x0_flat = _prepare_operands(transforms, slices, volume0, params, p=p)
    ref = _srr_cg_reference(A.astype(jnp.bfloat16), s_flat, w_flat, x0_flat,
                            n_iter=10, tol=0.0, output_relu=True).reshape(volume0.shape)

    for out in (out_res, out_str):
        assert out.shape == volume0.shape
        assert bool(jnp.all(jnp.isfinite(out)))
        assert bool(jnp.all(out >= 0.0))                 # output ReLU
        num = float(jnp.linalg.norm((out - ref).ravel()))
        den = float(jnp.linalg.norm(ref.ravel())) + 1e-8
        assert num / den < 5e-2, f"relative error {num / den:.3e}"

    print("KERNEL_OK")
</pallas_src>

<mosaic_0001>
module attributes {stable_mosaic.version = 11 : i64} {
  func.func @_srr_cg_kernel(%arg0: i32, %arg1: i32, %arg2: memref<640x512xbf16, #tpu.memory_space<any>>, %arg3: memref<1x640xf32, #tpu.memory_space<vmem>>, %arg4: memref<1x640xf32, #tpu.memory_space<vmem>>, %arg5: memref<1x512xf32, #tpu.memory_space<vmem>>, %arg6: memref<1x512xf32, #tpu.memory_space<vmem>>, %arg7: memref<640x512xbf16, #tpu.memory_space<vmem>>, %arg8: memref<!tpu.dma_semaphore, #tpu.memory_space<semaphore_mem>>, %arg9: memref<1x512xf32, #tpu.memory_space<vmem>>, %arg10: memref<1x512xf32, #tpu.memory_space<vmem>>, %arg11: memref<1x512xbf16, #tpu.memory_space<vmem>>, %arg12: memref<1x512xf32, #tpu.memory_space<vmem>>, %arg13: memref<1x1xf32, #tpu.memory_space<vmem>>) attributes {dimension_semantics = [#tpu.dimension_semantics<arbitrary>, #tpu.dimension_semantics<arbitrary>], iteration_bounds = array<i64: 11, 1>, scalar_prefetch = 0 : i64, scratch_operands = 7 : i64, tpu.core_type = #tpu.core_type<tc>, window_params = [{}, {pipeline_mode = #tpu.pipeline_mode<synchronous>, transform_indices = @transform_1, window_bounds = array<i64: 1, 640>}, {pipeline_mode = #tpu.pipeline_mode<synchronous>, transform_indices = @transform_2, window_bounds = array<i64: 1, 640>}, {pipeline_mode = #tpu.pipeline_mode<synchronous>, transform_indices = @transform_3, window_bounds = array<i64: 1, 512>}, {pipeline_mode = #tpu.pipeline_mode<synchronous>, transform_indices = @transform_4, window_bounds = array<i64: 1, 512>}]} {
    %c0_i32 = arith.constant 0 : i32
    %0 = arith.cmpi eq, %arg0, %c0_i32 : i32
    %c0_i32_0 = arith.constant 0 : i32
    %1 = arith.cmpi eq, %arg1, %c0_i32_0 : i32
    %2 = arith.andi %0, %1 : i1
    %3 = arith.extui %2 : i1 to i32
    %c0_i32_1 = arith.constant 0 : i32
    %4 = arith.cmpi ne, %3, %c0_i32_1 : i32
    scf.if %4 {
      tpu.enqueue_dma source(%arg2 : memref<640x512xbf16, #tpu.memory_space<any>>) target(%arg7 : memref<640x512xbf16, #tpu.memory_space<vmem>>) target_semaphore(%arg8 : memref<!tpu.dma_semaphore, #tpu.memory_space<semaphore_mem>>)
      tpu.wait_dma2 semaphore(%arg8 : memref<!tpu.dma_semaphore, #tpu.memory_space<semaphore_mem>>) src(%arg2 : memref<640x512xbf16, #tpu.memory_space<any>>) dst(%arg7 : memref<640x512xbf16, #tpu.memory_space<vmem>>)
      %c0_29 = arith.constant 0 : index
      %c0_30 = arith.constant 0 : index
      %43 = vector.load %arg5[%c0_29, %c0_30] : memref<1x512xf32, #tpu.memory_space<vmem>>, vector<1x512xf32>
      %c0_31 = arith.constant 0 : index
      %c0_32 = arith.constant 0 : index
      %44 = vector.load %arg6[%c0_31, %c0_32] : memref<1x512xf32, #tpu.memory_space<vmem>>, vector<1x512xf32>
      tpu.vector_store %arg6[%c0_31, %c0_32], %43 {strides = array<i32>} : memref<1x512xf32, #tpu.memory_space<vmem>>, vector<1x512xf32>,
      %45 = arith.truncf %43 : vector<1x512xf32> to vector<1x512xbf16>
      %c0_33 = arith.constant 0 : index
      %c0_34 = arith.constant 0 : index
      %46 = vector.load %arg11[%c0_33, %c0_34] : memref<1x512xbf16, #tpu.memory_space<vmem>>, vector<1x512xbf16>
      tpu.vector_store %arg11[%c0_33, %c0_34], %45 {strides = array<i32>} : memref<1x512xbf16, #tpu.memory_space<vmem>>, vector<1x512xbf16>,
    } else {
    }
    %c0_i32_2 = arith.constant 0 : i32
    %5 = arith.cmpi eq, %arg1, %c0_i32_2 : i32
    %6 = arith.extui %5 : i1 to i32
    %c0_i32_3 = arith.constant 0 : i32
    %7 = arith.cmpi ne, %6, %c0_i32_3 : i32
    scf.if %7 {
      %cst_29 = arith.constant 0.000000e+00 : f32
      %43 = vector.broadcast %cst_29 : f32 to vector<1x512xf32>
      %c0_30 = arith.constant 0 : index
      %c0_31 = arith.constant 0 : index
      %44 = vector.load %arg12[%c0_30, %c0_31] : memref<1x512xf32, #tpu.memory_space<vmem>>, vector<1x512xf32>
      tpu.vector_store %arg12[%c0_30, %c0_31], %43 {strides = array<i32>} : memref<1x512xf32, #tpu.memory_space<vmem>>, vector<1x512xf32>,
    } else {
    }
    %c0 = arith.constant 0 : index
    %c0_4 = arith.constant 0 : index
    %8 = vector.load %arg7[%c0, %c0_4] : memref<640x512xbf16, #tpu.memory_space<vmem>>, vector<640x512xbf16>
    %c0_5 = arith.constant 0 : index
    %c0_6 = arith.constant 0 : index
    %9 = vector.load %arg4[%c0_5, %c0_6] : memref<1x640xf32, #tpu.memory_space<vmem>>, vector<1x640xf32>
    %c0_7 = arith.constant 0 : index
    %c0_8 = arith.constant 0 : index
    %10 = vector.load %arg11[%c0_7, %c0_8] : memref<1x512xbf16, #tpu.memory_space<vmem>>, vector<1x512xbf16>
    %cst = arith.constant dense<0.000000e+00> : vector<1x640xf32>
    %11 = tpu.matmul %10, %8, %cst {dimension_numbers = #tpu.dot_dimension_numbers<[1], [1], [0], [0], [0, 0, 1, 0], [], []>} : vector<1x512xbf16>, vector<640x512xbf16>, vector<1x640xf32> -> vector<1x640xf32>
    %c0_i32_9 = arith.constant 0 : i32
    %12 = arith.cmpi eq, %arg0, %c0_i32_9 : i32
    %cst_10 = arith.constant 1.000000e+00 : f32
    %cst_11 = arith.constant 0.000000e+00 : f32
    %13 = arith.select %12, %cst_10, %cst_11 : f32
    %c0_12 = arith.constant 0 : index
    %c0_13 = arith.constant 0 : index
    %14 = vector.load %arg3[%c0_12, %c0_13] : memref<1x640xf32, #tpu.memory_space<vmem>>, vector<1x640xf32>
    %15 = vector.broadcast %13 : f32 to vector<1x640xf32>
    %16 = arith.mulf %15, %14 : vector<1x640xf32>
    %cst_14 = arith.constant 2.000000e+00 : f32
    %17 = arith.mulf %cst_14, %13 : f32
    %cst_15 = arith.constant 1.000000e+00 : f32
    %18 = arith.subf %cst_15, %17 : f32
    %19 = vector.broadcast %18 : f32 to vector<1x640xf32>
    %20 = arith.mulf %19, %11 : vector<1x640xf32>
    %21 = arith.addf %16, %20 : vector<1x640xf32>
    %22 = arith.mulf %9, %21 : vector<1x640xf32>
    %23 = arith.truncf %22 : vector<1x640xf32> to vector<1x640xbf16>
    %c0_16 = arith.constant 0 : index
    %c0_17 = arith.constant 0 : index
    %24 = vector.load %arg12[%c0_16, %c0_17] : memref<1x512xf32, #tpu.memory_space<vmem>>, vector<1x512xf32>
    %cst_18 = arith.constant dense<0.000000e+00> : vector<1x512xf32>
    %25 = tpu.matmul %23, %8, %cst_18 {dimension_numbers = #tpu.dot_dimension_numbers<[1], [0], [0], [1], [0, 0, 1, 1], [], []>} : vector<1x640xbf16>, vector<640x512xbf16>, vector<1x512xf32> -> vector<1x512xf32>
    %26 = arith.addf %24, %25 : vector<1x512xf32>
    %c0_19 = arith.constant 0 : index
    %c0_20 = arith.constant 0 : index
    %27 = vector.load %arg12[%c0_19, %c0_20] : memref<1x512xf32, #tpu.memory_space<vmem>>, vector<1x512xf32>
    tpu.vector_store %arg12[%c0_19, %c0_20], %26 {strides = array<i32>} : memref<1x512xf32, #tpu.memory_space<vmem>>, vector<1x512xf32>,
    %c0_i32_21 = arith.constant 0 : i32
    %28 = arith.cmpi eq, %arg0, %c0_i32_21 : i32
    %c0_i32_22 = arith.constant 0 : i32
    %29 = arith.cmpi eq, %arg1, %c0_i32_22 : i32
    %30 = arith.andi %28, %29 : i1
    %31 = arith.extui %30 : i1 to i32
    %c0_i32_23 = arith.constant 0 : i32
    %32 = arith.cmpi ne, %31, %c0_i32_23 : i32
    scf.if %32 {
      %c0_29 = arith.constant 0 : index
      %c0_30 = arith.constant 0 : index
      %43 = vector.load %arg12[%c0_29, %c0_30] : memref<1x512xf32, #tpu.memory_space<vmem>>, vector<1x512xf32>
      %c0_31 = arith.constant 0 : index
      %c0_32 = arith.constant 0 : index
      %44 = vector.load %arg9[%c0_31, %c0_32] : memref<1x512xf32, #tpu.memory_space<vmem>>, vector<1x512xf32>
      tpu.vector_store %arg9[%c0_31, %c0_32], %43 {strides = array<i32>} : memref<1x512xf32, #tpu.memory_space<vmem>>, vector<1x512xf32>,
      %c0_33 = arith.constant 0 : index
      %c0_34 = arith.constant 0 : index
      %45 = vector.load %arg10[%c0_33, %c0_34] : memref<1x512xf32, #tpu.memory_space<vmem>>, vector<1x512xf32>
      tpu.vector_store %arg10[%c0_33, %c0_34], %43 {strides = array<i32>} : memref<1x512xf32, #tpu.memory_space<vmem>>, vector<1x512xf32>,
      %46 = arith.truncf %43 : vector<1x512xf32> to vector<1x512xbf16>
      %c0_35 = arith.constant 0 : index
      %c0_36 = arith.constant 0 : index
      %47 = vector.load %arg11[%c0_35, %c0_36] : memref<1x512xbf16, #tpu.memory_space<vmem>>, vector<1x512xbf16>
      tpu.vector_store %arg11[%c0_35, %c0_36], %46 {strides = array<i32>} : memref<1x512xbf16, #tpu.memory_space<vmem>>, vector<1x512xbf16>,
      %48 = arith.mulf %43, %43 : vector<1x512xf32>
      %49 = vector.shape_cast %48 : vector<1x512xf32> to vector<1x1x512xf32>
      %cst_37 = arith.constant dense<0.000000e+00> : vector<1xf32>
      %50 = vector.multi_reduction <add>, %49, %cst_37 [1, 2] : vector<1x1x512xf32> to vector<1xf32>
      %51 = vector.shape_cast %50 : vector<1xf32> to vector<1x1x1xf32>
      %52 = vector.extract %51[0, 0, 0] : f32 from vector<1x1x1xf32>
      %53 = vector.broadcast %52 : f32 to vector<1x1xf32>
      %c0_38 = arith.constant 0 : index
      %c0_39 = arith.constant 0 : index
      %54 = vector.load %arg13[%c0_38, %c0_39] : memref<1x1xf32, #tpu.memory_space<vmem>>, vector<1x1xf32>
      tpu.vector_store %arg13[%c0_38, %c0_39], %53 {strides = array<i32>} : memref<1x1xf32, #tpu.memory_space<vmem>>, vector<1x1xf32>,
    } else {
    }
    %c0_i32_24 = arith.constant 0 : i32
    %33 = arith.cmpi sgt, %arg0, %c0_i32_24 : i32
    %c0_i32_25 = arith.constant 0 : i32
    %34 = arith.cmpi eq, %arg1, %c0_i32_25 : i32
    %35 = arith.andi %33, %34 : i1
    %36 = arith.extui %35 : i1 to i32
    %c0_i32_26 = arith.constant 0 : i32
    %37 = arith.cmpi ne, %36, %c0_i32_26 : i32
    scf.if %37 {
      %c0_29 = arith.constant 0 : index
      %c0_30 = arith.constant 0 : index
      %43 = vector.load %arg13[%c0_29, %c0_30] : memref<1x1xf32, #tpu.memory_space<vmem>>, vector<1x1xf32>
      %c0_31 = arith.constant 0 : index
      %c0_32 = arith.constant 0 : index
      %44 = vector.load %arg10[%c0_31, %c0_32] : memref<1x512xf32, #tpu.memory_space<vmem>>, vector<1x512xf32>
      %c0_33 = arith.constant 0 : index
      %c0_34 = arith.constant 0 : index
      %45 = vector.load %arg12[%c0_33, %c0_34] : memref<1x512xf32, #tpu.memory_space<vmem>>, vector<1x512xf32>
      %cst_35 = arith.constant 0.000000e+00 : f32
      %46 = vector.broadcast %cst_35 : f32 to vector<1x1xf32>
      %47 = arith.cmpf ogt, %43, %46 : vector<1x1xf32>
      %48 = arith.mulf %44, %45 : vector<1x512xf32>
      %49 = vector.shape_cast %48 : vector<1x512xf32> to vector<1x1x512xf32>
      %cst_36 = arith.constant dense<0.000000e+00> : vector<1xf32>
      %50 = vector.multi_reduction <add>, %49, %cst_36 [1, 2] : vector<1x1x512xf32> to vector<1xf32>
      %51 = vector.shape_cast %50 : vector<1xf32> to vector<1x1x1xf32>
      %52 = vector.extract %51[0, 0, 0] : f32 from vector<1x1x1xf32>
      %53 = vector.broadcast %52 : f32 to vector<1x1xf32>
      %cst_37 = arith.constant 0.000000e+00 : f32
      %54 = vector.broadcast %cst_37 : f32 to vector<1x1xf32>
      %55 = arith.cmpf one, %53, %54 : vector<1x1xf32>
      %56 = arith.andi %47, %55 : vector<1x1xi1>
      %57 = arith.divf %43, %53 : vector<1x1xf32>
      %cst_38 = arith.constant 0.000000e+00 : f32
      %58 = vector.broadcast %cst_38 : f32 to vector<1x1xf32>
      %59 = arith.select %56, %57, %58 : vector<1x1xi1>, vector<1x1xf32>
      %c0_39 = arith.constant 0 : index
      %c0_40 = arith.constant 0 : index
      %60 = vector.load %arg6[%c0_39, %c0_40] : memref<1x512xf32, #tpu.memory_space<vmem>>, vector<1x512xf32>
      %61 = vector.broadcast %59 : vector<1x1xf32> to vector<1x512xf32>
      %62 = arith.mulf %61, %44 : vector<1x512xf32>
      %63 = arith.addf %60, %62 : vector<1x512xf32>
      %c0_41 = arith.constant 0 : index
      %c0_42 = arith.constant 0 : index
      %64 = vector.load %arg9[%c0_41, %c0_42] : memref<1x512xf32, #tpu.memory_space<vmem>>, vector<1x512xf32>
      %65 = vector.broadcast %59 : vector<1x1xf32> to vector<1x512xf32>
      %66 = arith.mulf %65, %45 : vector<1x512xf32>
      %67 = arith.subf %64, %66 : vector<1x512xf32>
      %68 = arith.mulf %67, %67 : vector<1x512xf32>
      %69 = vector.shape_cast %68 : vector<1x512xf32> to vector<1x1x512xf32>
      %cst_43 = arith.constant dense<0.000000e+00> : vector<1xf32>
      %70 = vector.multi_reduction <add>, %69, %cst_43 [1, 2] : vector<1x1x512xf32> to vector<1xf32>
      %71 = vector.shape_cast %70 : vector<1xf32> to vector<1x1x1xf32>
      %72 = vector.extract %71[0, 0, 0] : f32 from vector<1x1x1xf32>
      %73 = vector.broadcast %72 : f32 to vector<1x1xf32>
      %cst_44 = arith.constant 0.000000e+00 : f32
      %74 = vector.broadcast %cst_44 : f32 to vector<1x1xf32>
      %75 = arith.cmpf ogt, %73, %74 : vector<1x1xf32>
      %76 = arith.andi %47, %75 : vector<1x1xi1>
      %cst_45 = arith.constant 0.000000e+00 : f32
      %77 = vector.broadcast %cst_45 : f32 to vector<1x1xf32>
      %78 = arith.cmpf one, %43, %77 : vector<1x1xf32>
      %79 = arith.andi %76, %78 : vector<1x1xi1>
      %80 = arith.divf %73, %43 : vector<1x1xf32>
      %cst_46 = arith.constant 0.000000e+00 : f32
      %81 = vector.broadcast %cst_46 : f32 to vector<1x1xf32>
      %82 = arith.select %79, %80, %81 : vector<1x1xi1>, vector<1x1xf32>
      %83 = vector.broadcast %82 : vector<1x1xf32> to vector<1x512xf32>
      %84 = arith.mulf %83, %44 : vector<1x512xf32>
      %85 = arith.addf %67, %84 : vector<1x512xf32>
      %86 = vector.shape_cast %76 : vector<1x1xi1> to vector<1x1xi1>
      %87 = vector.broadcast %86 : vector<1x1xi1> to vector<1x512xi1>
      %88 = arith.select %87, %85, %44 : vector<1x512xi1>, vector<1x512xf32>
      %c0_47 = arith.constant 0 : index
      %c0_48 = arith.constant 0 : index
      %89 = vector.load %arg6[%c0_47, %c0_48] : memref<1x512xf32, #tpu.memory_space<vmem>>, vector<1x512xf32>
      tpu.vector_store %arg6[%c0_47, %c0_48], %63 {strides = array<i32>} : memref<1x512xf32, #tpu.memory_space<vmem>>, vector<1x512xf32>,
      %c0_49 = arith.constant 0 : index
      %c0_50 = arith.constant 0 : index
      %90 = vector.load %arg9[%c0_49, %c0_50] : memref<1x512xf32, #tpu.memory_space<vmem>>, vector<1x512xf32>
      tpu.vector_store %arg9[%c0_49, %c0_50], %67 {strides = array<i32>} : memref<1x512xf32, #tpu.memory_space<vmem>>, vector<1x512xf32>,
      %c0_51 = arith.constant 0 : index
      %c0_52 = arith.constant 0 : index
      %91 = vector.load %arg10[%c0_51, %c0_52] : memref<1x512xf32, #tpu.memory_space<vmem>>, vector<1x512xf32>
      tpu.vector_store %arg10[%c0_51, %c0_52], %88 {strides = array<i32>} : memref<1x512xf32, #tpu.memory_space<vmem>>, vector<1x512xf32>,
      %92 = arith.truncf %88 : vector<1x512xf32> to vector<1x512xbf16>
      %c0_53 = arith.constant 0 : index
      %c0_54 = arith.constant 0 : index
      %93 = vector.load %arg11[%c0_53, %c0_54] : memref<1x512xbf16, #tpu.memory_space<vmem>>, vector<1x512xbf16>
      tpu.vector_store %arg11[%c0_53, %c0_54], %92 {strides = array<i32>} : memref<1x512xbf16, #tpu.memory_space<vmem>>, vector<1x512xbf16>,
      %94 = arith.select %47, %73, %43 : vector<1x1xi1>, vector<1x1xf32>
      %c0_55 = arith.constant 0 : index
      %c0_56 = arith.constant 0 : index
      %95 = vector.load %arg13[%c0_55, %c0_56] : memref<1x1xf32, #tpu.memory_space<vmem>>, vector<1x1xf32>
      tpu.vector_store %arg13[%c0_55, %c0_56], %94 {strides = array<i32>} : memref<1x1xf32, #tpu.memory_space<vmem>>, vector<1x1xf32>,
    } else {
    }
    %c10_i32 = arith.constant 10 : i32
    %38 = arith.cmpi eq, %arg0, %c10_i32 : i32
    %c0_i32_27 = arith.constant 0 : i32
    %39 = arith.cmpi eq, %arg1, %c0_i32_27 : i32
    %40 = arith.andi %38, %39 : i1
    %41 = arith.extui %40 : i1 to i32
    %c0_i32_28 = arith.constant 0 : i32
    %42 = arith.cmpi ne, %41, %c0_i32_28 : i32
    scf.if %42 {
      %c0_29 = arith.constant 0 : index
      %c0_30 = arith.constant 0 : index
      %43 = vector.load %arg6[%c0_29, %c0_30] : memref<1x512xf32, #tpu.memory_space<vmem>>, vector<1x512xf32>
      %cst_31 = arith.constant 0.000000e+00 : f32
      %44 = vector.broadcast %cst_31 : f32 to vector<1x512xf32>
      %45 = arith.maximumf %43, %44 : vector<1x512xf32>
      %c0_32 = arith.constant 0 : index
      %c0_33 = arith.constant 0 : index
      %46 = vector.load %arg6[%c0_32, %c0_33] : memref<1x512xf32, #tpu.memory_space<vmem>>, vector<1x512xf32>
      tpu.vector_store %arg6[%c0_32, %c0_33], %45 {strides = array<i32>} : memref<1x512xf32, #tpu.memory_space<vmem>>, vector<1x512xf32>,
    } else {
    }
    return
  }
  func.func @transform_1(%arg0: i32, %arg1: i32) -> (i32, i32) {
    %c0_i32 = arith.constant 0 : i32
    %c0_i32_0 = arith.constant 0 : i32
    %c0_i32_1 = arith.constant 0 : i32
    return %c0_i32, %c0_i32_0 : i32, i32
  }
  func.func @transform_2(%arg0: i32, %arg1: i32) -> (i32, i32) {
    %c0_i32 = arith.constant 0 : i32
    %c0_i32_0 = arith.constant 0 : i32
    %c0_i32_1 = arith.constant 0 : i32
    return %c0_i32, %c0_i32_0 : i32, i32
  }
  func.func @transform_3(%arg0: i32, %arg1: i32) -> (i32, i32) {
    %c0_i32 = arith.constant 0 : i32
    %c0_i32_0 = arith.constant 0 : i32
    %c0_i32_1 = arith.constant 0 : i32
    return %c0_i32, %c0_i32_0 : i32, i32
  }
  func.func @transform_4(%arg0: i32, %arg1: i32) -> (i32, i32) {
    %c0_i32 = arith.constant 0 : i32
    %c0_i32_0 = arith.constant 0 : i32
    %c0_i32_1 = arith.constant 0 : i32
    return %c0_i32, %c0_i32_0 : i32, i32
  }
}

</mosaic_0001>

<llo_original>
// kernel: tpu_custom_call.1
$region0: #{tpu_custom_call.1}
  #allocation0 [shape = 'u32[]', space=smem, size = 0x4, offset = 0x4, fixed_abs, tag = 'smem constant byte address 0x4 - core index']
  #allocation1 [shape = 'u32[144,128]{1,0:T(1,128)}', space=vmem, size = 0x12000, scoped, tag = 'internal scratch']
  #allocation2 [shape = 'bf16[640,512]{1,0:T(16,128)(2,1)}', space=vmem, size = 0xa0000, scoped, tag = 'scratch operand']
  #allocation3 [shape = 's32[1]{0}', space=sflag, size = 0x4, scoped, tag = 'scratch operand']
  #allocation4 [shape = 'f32[1,512]{1,0:T(1,128)}', space=vmem, size = 0x800, scoped, tag = 'scratch operand']
  #allocation5 [shape = 'f32[1,512]{1,0:T(1,128)}', space=vmem, size = 0x800, scoped, tag = 'scratch operand']
  #allocation6 [shape = 'bf16[1,512]{1,0:T(2,128)(2,1)}', space=vmem, size = 0x800, scoped, tag = 'scratch operand']
  #allocation7 [shape = 'f32[1,512]{1,0:T(1,128)}', space=vmem, size = 0x800, scoped, tag = 'scratch operand']
  #allocation8 [shape = 'f32[1,1]{1,0:T(1,128)}', space=vmem, size = 0x200, scoped, tag = 'scratch operand']
  #allocation13 [shape = 's32[]', space=sflag, size = 0x4, offset = 0, fixed_abs, tag = 'sflag constant byte address 0x0 - dummy sync flag']
  %s0 = inlined_call_operand.hbm [shape: bf16[640,512], index: 0, kind: input, shape index: {}]
  %s1 = inlined_call_operand.vmem [shape: f32[1,640], index: 1, kind: input, shape index: {}]
  %s2 = inlined_call_operand.vmem [shape: f32[1,640], index: 2, kind: input, shape index: {}]
  %s3 = inlined_call_operand.hbm [shape: f32[1,512], index: 3, kind: input, shape index: {}, may-alias: {3,4}]
  %s4 = inlined_call_operand.hbm [shape: f32[1,512], index: 4, kind: output, shape index: {}, may-alias: {3,4}]
  %s5 = sld [smem:[#allocation0]]
  $region69: #{tpu_custom_call.1} parent=0
    _
  %s7 = ssub.s32 1, %s5
  %s8 = scalar_select 0, %s7, %s5
  $region1: #{tpu_custom_call.1} parent=0
    #allocation9 [shape = 'u8[2048]{0}', space=vmem, size = 0x800, scoped, tag = 'input window, operand 3, single buffered']
    #allocation10 [shape = 's32[2]{0}', space=sflag, size = 0x8, scoped, tag = 'scoped memory for tpu_custom_call.1']
    #allocation11 [shape = 's32[2]{0}', space=sflag, size = 0x8, scoped, tag = 'scoped memory for tpu_custom_call.1']
    #allocation12 [shape = 'u8[2048]{0}', space=vmem, size = 0x800, scoped, tag = 'output window, operand 0, single buffered']
    %9 = vsyncpa [#allocation10], 0
    %10 = vsyncpa [#allocation11], 0
    loop: start=0, step=1, limit=13
    $region2: #{tpu_custom_call.1} parent=1 // loop_pre_header
      _
    $region3: #{tpu_custom_call.1} parent=1 // loop_header
      %s12 = sphi 0, %s16
      %p13 = scmp.ge.s32.totalorder %s12, 13
      %s19 = sphi 0, %s31
      %s20 = sphi 0, %s27
      %s21 = sphi 0, %s19
      %s22 = sphi 0, %s20
      %s23 = sphi 0, %s21
      %s24 = sphi 0, %s22
      %s32 = sphi 0, %s32
      %s34 = sphi 0, %s32
      %s35 = sphi 0, %s34
      %s49 = sphi 0, %s35
      %s53 = sphi 0, %s53
      %s55 = sphi 0, %s53
      %s56 = sphi 0, %s55
      %s70 = sphi 0, %s56
      %s74 = sphi 0, %s74
      %s76 = sphi 0, %s74
      %s77 = sphi 0, %s76
      %s91 = sphi 0, %s77
      %s95 = sphi 0, %s95
      %s97 = sphi 0, %s95
      %s98 = sphi 0, %s97
      %s112 = sphi 0, %s98
    $region4: #{tpu_custom_call.1} parent=1 // loop_header_branch
      %15 = sbr.rel (%p13) target = $region8
    $region5: #{tpu_custom_call.1} parent=1 // loop_body
      %s17 = ssub.s32 %s12, 1
      %s18 = ssub.s32 %s12, 2
      %s25 = sadd.s32 1, %s20
      %p26 = scmp.ge.s32.totalorder %s25, 1
      %s27 = scalar_select %p26, 0, %s25
      %s28 = sadd.s32 1, %s19
      %s29 = scalar_select %p26, %s28, %s19
      %p30 = scmp.ge.s32.totalorder %s29, 11
      %s31 = scalar_select %p30, 0, %s29
      %s33 = sadd.s32 %s32, 1
      %p36 = scmp.eq.s32.totalorder %s12, 10
      %p37 = scmp.ne.s32.totalorder %s32, %s34
      %p38 = scmp.eq.s32.totalorder %s12, 0
      %p39 = por %p37, %p38
      %p40 = scmp.ne.s32.totalorder %s32, %s34
      %p41 = scmp.eq.s32.totalorder %s17, 10
      %p42 = por %p40, %p41
      %p43 = scmp.ne.s32.totalorder %s34, %s35
      %p44 = scmp.eq.s32.totalorder %s17, 0
      %p45 = por %p43, %p44
      %p46 = scmp.ne.s32.totalorder %s34, %s35
      %p47 = scmp.eq.s32.totalorder %s18, 10
      %p48 = por %p46, %p47
      %p50 = scmp.ne.s32.totalorder %s35, %s49
      %p51 = scmp.eq.s32.totalorder %s18, 0
      %p52 = por %p50, %p51
      %s54 = sadd.s32 %s53, 1
      %p57 = scmp.eq.s32.totalorder %s12, 10
      %p58 = scmp.ne.s32.totalorder %s53, %s55
      %p59 = scmp.eq.s32.totalorder %s12, 0
      %p60 = por %p58, %p59
      %p61 = scmp.ne.s32.totalorder %s53, %s55
      %p62 = scmp.eq.s32.totalorder %s17, 10
      %p63 = por %p61, %p62
      %p64 = scmp.ne.s32.totalorder %s55, %s56
      %p65 = scmp.eq.s32.totalorder %s17, 0
      %p66 = por %p64, %p65
      %p67 = scmp.ne.s32.totalorder %s55, %s56
      %p68 = scmp.eq.s32.totalorder %s18, 10
      %p69 = por %p67, %p68
      %p71 = scmp.ne.s32.totalorder %s56, %s70
      %p72 = scmp.eq.s32.totalorder %s18, 0
      %p73 = por %p71, %p72
      %s75 = sadd.s32 %s74, 1
      %p78 = scmp.eq.s32.totalorder %s12, 10
      %p79 = scmp.ne.s32.totalorder %s74, %s76
      %p80 = scmp.eq.s32.totalorder %s12, 0
      %p81 = por %p79, %p80
      %p82 = scmp.ne.s32.totalorder %s74, %s76
      %p83 = scmp.eq.s32.totalorder %s17, 10
      %p84 = por %p82, %p83
      %p85 = scmp.ne.s32.totalorder %s76, %s77
      %p86 = scmp.eq.s32.totalorder %s17, 0
      %p87 = por %p85, %p86
      %p88 = scmp.ne.s32.totalorder %s76, %s77
      %p89 = scmp.eq.s32.totalorder %s18, 10
      %p90 = por %p88, %p89
      %p92 = scmp.ne.s32.totalorder %s77, %s91
      %p93 = scmp.eq.s32.totalorder %s18, 0
      %p94 = por %p92, %p93
      %s96 = sadd.s32 %s95, 1
      %p99 = scmp.eq.s32.totalorder %s12, 10
      %p100 = scmp.ne.s32.totalorder %s95, %s97
      %p101 = scmp.eq.s32.totalorder %s12, 0
      %p102 = por %p100, %p101
      %p103 = scmp.ne.s32.totalorder %s95, %s97
      %p104 = scmp.eq.s32.totalorder %s17, 10
      %p105 = por %p103, %p104
      %p106 = scmp.ne.s32.totalorder %s97, %s98
      %p107 = scmp.eq.s32.totalorder %s17, 0
      %p108 = por %p106, %p107
      %p109 = scmp.ne.s32.totalorder %s97, %s98
      %p110 = scmp.eq.s32.totalorder %s18, 10
      %p111 = por %p109, %p110
      %p113 = scmp.ne.s32.totalorder %s98, %s112
      %p114 = scmp.eq.s32.totalorder %s18, 0
      %p115 = por %p113, %p114
      %p116 = scmp.le.s32.totalorder 1, %s12
      %p117 = scmp.lt.s32.totalorder %s12, 12
      %p118 = pnand %p116, %p117
      %p119 = pneg %p118
      // Predicated region
      $region9: #{tpu_custom_call.1} parent=5 // pred_check
        _
      $region10: #{tpu_custom_call.1} parent=5 // pred_check_branch
        %121 = sbr.rel (%p118) target = $region12
      $region11: #{tpu_custom_call.1} parent=5 // pred_region
        %s122 = ssub.s32 %s12, 1
        // Predicated region
        $region13: #{tpu_custom_call.1} parent=11 // pred_check
          %p123 = pneg %p45
        $region14: #{tpu_custom_call.1} parent=11 // pred_check_branch
          %125 = sbr.rel (%p123) target = $region16
        $region15: #{tpu_custom_call.1} parent=11 // pred_region
          _
        $region16: #{tpu_custom_call.1} parent=11 // pred_fallthru
          _
        // Predicated region
        $region17: #{tpu_custom_call.1} parent=11 // pred_check
          %p126 = pneg %p66
        $region18: #{tpu_custom_call.1} parent=11 // pred_check_branch
          %128 = sbr.rel (%p126) target = $region20
        $region19: #{tpu_custom_call.1} parent=11 // pred_region
          _
        $region20: #{tpu_custom_call.1} parent=11 // pred_fallthru
          _
        // Predicated region
        $region21: #{tpu_custom_call.1} parent=11 // pred_check
          %p129 = pneg %p87
        $region22: #{tpu_custom_call.1} parent=11 // pred_check_branch
          %131 = sbr.rel (%p129) target = $region24
        $region23: #{tpu_custom_call.1} parent=11 // pred_region
          %s133 = ssub.s32 64, 64
          %134 = vsyncadd [#allocation10], %s133
          %s136 = sshll.u32 [#allocation9], 4
          %s137 = int_to_ptr.vmem [resolvable:$true] %s136
          %139 = dma.hbm_to_vmem [thread:$0]  %s3, 64, %s137, [#allocation10]
        $region24: #{tpu_custom_call.1} parent=11 // pred_fallthru
          _
      $region12: #{tpu_custom_call.1} parent=5 // pred_fallthru
        _
      %p140 = scmp.lt.s32.totalorder %s12, 11
      // Predicated region
      $region25: #{tpu_custom_call.1} parent=5 // pred_check
        %p141 = pneg %p140
      $region26: #{tpu_custom_call.1} parent=5 // pred_check_branch
        %143 = sbr.rel (%p141) target = $region28
      $region27: #{tpu_custom_call.1} parent=5 // pred_region
        _
      $region28: #{tpu_custom_call.1} parent=5 // pred_fallthru
        _
      %p144 = scmp.le.s32.totalorder 1, %s12
      %p145 = scmp.lt.s32.totalorder %s12, 12
      %p146 = pnand %p144, %p145
      %p147 = pneg %p146
      // Predicated region
      $region29: #{tpu_custom_call.1} parent=5 // pred_check
        _
      $region30: #{tpu_custom_call.1} parent=5 // pred_check_branch
        %149 = sbr.rel (%p146) target = $region32
      $region31: #{tpu_custom_call.1} parent=5 // pred_region
        %s150 = ssub.s32 %s12, 1
        // Predicated region
        $region33: #{tpu_custom_call.1} parent=31 // pred_check
          %p151 = pneg %p87
        $region34: #{tpu_custom_call.1} parent=31 // pred_check_branch
          %153 = sbr.rel (%p151) target = $region36
        $region35: #{tpu_custom_call.1} parent=31 // pred_region
          %154 = dma.done [#allocation10], 64
        $region36: #{tpu_custom_call.1} parent=31 // pred_fallthru
          _
        %p155 = pneg %p45
        %p156 = pneg %p42
        %p157 = pneg %p66
        %p158 = pneg %p63
        %p159 = pneg %p87
        %p160 = pneg %p84
        %p161 = pneg %p108
        %p162 = pneg %p105
        %p164 = scmp.eq.s32.totalorder %s21, 0
        %p165 = scmp.eq.s32.totalorder %s22, 0
        %p166 = pnand %p164, %p165
        %p167 = pneg %p166
        // Predicated region
        $region37: #{tpu_custom_call.1} parent=31 // pred_check
          _
        $region38: #{tpu_custom_call.1} parent=31 // pred_check_branch
          %169 = sbr.rel (%p166) target = $region40
        $region39: #{tpu_custom_call.1} parent=31 // pred_region
          #allocation14 [shape = 'u32[9]{0}', space=smem, size = 0x24, scoped, tag = 'DMA stride descriptor']
          %s171 = sshll.u32 1, 14
          %s172 = sxor.u32 4294967295, %s171
          %s174 = sld [smem:[#allocation0]]
          %s175 = sadd.s32 2, %s174
          %s177 = sshll.u32 7, 26
          %s178 = sxor.u32 4294967295, %s177
          %s179 = sand.u32 0, %s178
          %s180 = sshll.u32 %s175, 26
          %s181 = sor.u32 %s179, %s180
          %s182 = sshll.u32 [#allocation2], 4
          %s183 = int_to_ptr.vmem [resolvable:$true] %s182
          %186 = sst [smem:[#allocation14]] 512
          %s187 = scalar_lea.smem [#allocation14], 1
          %188 = sst [smem:[%s187]] 512
          %s189 = scalar_lea.smem [#allocation14], 2
          %190 = sst [smem:[%s189]] 4
          %s191 = scalar_lea.smem [#allocation14], 3
          %192 = sst [smem:[%s191]] 64
          %s193 = scalar_lea.smem [#allocation14], 4
          %194 = sst [smem:[%s193]] 128
          %s195 = scalar_lea.smem [#allocation14], 5
          %196 = sst [smem:[%s195]] 2
          %s197 = scalar_lea.smem [#allocation14], 6
          %198 = sst [smem:[%s197]] 256
          %s199 = scalar_lea.smem [#allocation14], 7
          %200 = sst [smem:[%s199]] 64
          %s201 = scalar_lea.smem [#allocation14], 8
          %202 = sst [smem:[%s201]] 4
          %204 = dma.general %s0, 20480, %s183, [#allocation3], [#allocation13], [#allocation14], %s181, 0
          %s205 = smul.u32 4, 80
          %s206 = smul.u32 %s205, 4
          %s207 = sshll.u32 %s206, 4
          %208 = dma.done [#allocation3], %s207
          %v209 = vld [vmem:[#allocation9] sm:$0xf]
          %v210 = vlaneseq
          %vm211 = vcmp.ge.s32.totalorder %v210, 0
          %vm212 = vcmp.lt.s32.totalorder %v210, 512
          %vm213 = vmand %vm211, %vm212
          %214 = vst.msk [vmem:[#allocation12] sm:$0xf] %vm213, %v209
          %v216 = vlaneseq
          %v217 = vshrl.u32 %v216, 7
          %v218 = vsub.s32 0, %v217
          %v219 = vrot.slane %v209, %v218
          %v220 = vlaneseq
          %v221 = vshrl.u32 %v220, 7
          %v222 = vsub.s32 1, %v221
          %v223 = vrot.slane %v209, %v222
          %v224 = vlaneseq
          %v225 = vshrl.u32 %v224, 7
          %v226 = vsub.s32 2, %v225
          %v227 = vrot.slane %v209, %v226
          %v228 = vlaneseq
          %v229 = vshrl.u32 %v228, 7
          %v230 = vsub.s32 3, %v229
          %v231 = vrot.slane %v209, %v230
          %v236 = vpack.c.bf16 %v219, %v219
          %v237 = vpack.c.bf16 %v223, %v223
          %v238 = vpack.c.bf16 %v227, %v227
          %v239 = vpack.c.bf16 %v231, %v231
          %v244 = vcombine.low %v236, %v237
          %v245 = vcombine.low %v238, %v239
          %v247 = vunpack.c.l.s4 1966171168
          %v248 = vunpack.c.0.s8 %v247
          %v249 = vlaneseq
          %v250 = vshrl.u32 %v249, 7
          %v251 = vsub.s32 %v248, %v250
          %v252 = vrot.slane %v244, %v251
          %v254 = vunpack.c.l.s4 1966171168
          %v255 = vunpack.c.0.s8 %v254
          %v256 = vlaneseq
          %v257 = vshrl.u32 %v256, 7
          %v258 = vsub.s32 %v255, %v257
          %v259 = vrot.slane %v245, %v258
          %v260 = vcombine.low %v252, %v259
          %v262 = vunpack.c.l.s4 1966171168
          %v263 = vunpack.c.0.s8 %v262
          %v264 = vlaneseq
          %v265 = vshrl.u32 %v264, 7
          %v266 = vsub.s32 %v263, %v265
          %v267 = vrot.slane %v260, %v266
          %vm269 = vcmask 1040384
          %vm270 = vsmask.f32 256
          %vm271 = vmand %vm269, %vm270
          %vm272 = vcmask 1041409
          %vm273 = vsmask.f32 1280
          %vm274 = vmand %vm272, %vm273
          %vm275 = vmor %vm274, %vm271
          %vm276 = vcmask 1042434
          %vm277 = vsmask.f32 2304
          %vm278 = vmand %vm276, %vm277
          %vm279 = vmor %vm278, %vm275
          %vm280 = vcmask 1043459
          %vm281 = vsmask.f32 3328
          %vm282 = vmand %vm280, %vm281
          %vm283 = vmor %vm282, %vm279
          %v284 = vld [vmem:[#allocation6] sm:$0xf]
          %v285 = vsel %vm283, %v267, %v284
          %286 = vst [vmem:[#allocation6] sm:$0xf] %v285
        $region40: #{tpu_custom_call.1} parent=31 // pred_fallthru
          _
        // Predicated region
        $region41: #{tpu_custom_call.1} parent=31 // pred_check
          %p287 = pneg %p165
        $region42: #{tpu_custom_call.1} parent=31 // pred_check_branch
          %289 = sbr.rel (%p287) target = $region44
        $region43: #{tpu_custom_call.1} parent=31 // pred_region
          %v290 = vlaneseq
          %vm291 = vcmp.ge.s32.totalorder %v290, 0
          %vm292 = vcmp.lt.s32.totalorder %v290, 512
          %vm293 = vmand %vm291, %vm292
          %294 = vst.msk [vmem:[#allocation7] sm:$0xf] %vm293, 0.0
        $region44: #{tpu_custom_call.1} parent=31 // pred_fallthru
          _
        %v295 = vld [vmem:[#allocation2] sm:$0xff]
        %v296 = vld [vmem:[#allocation2 + $0x8] sm:$0xff]
        %v297 = vld [vmem:[#allocation2 + $0x10] sm:$0xff]
        %v298 = vld [vmem:[#allocation2 + $0x18] sm:$0xff]
        %v299 = vld [vmem:[#allocation2 + $0x20] sm:$0xff]
        %v300 = vld [vmem:[#allocation2 + $0x28] sm:$0xff]
        %v301 = vld [vmem:[#allocation2 + $0x30] sm:$0xff]
        %v302 = vld [vmem:[#allocation2 + $0x38] sm:$0xff]
        %v303 = vld [vmem:[#allocation2 + $0x40] sm:$0xff]
        %v304 = vld [vmem:[#allocation2 + $0x48] sm:$0xff]
        %v305 = vld [vmem:[#allocation2 + $0x50] sm:$0xff]
        %v306 = vld [vmem:[#allocation2 + $0x58] sm:$0xff]
        %v307 = vld [vmem:[#allocation2 + $0x60] sm:$0xff]
        %v308 = vld [vmem:[#allocation2 + $0x68] sm:$0xff]
        %v309 = vld [vmem:[#allocation2 + $0x70] sm:$0xff]
        %v310 = vld [vmem:[#allocation2 + $0x78] sm:$0xff]
        %v311 = vld [vmem:[#allocation2 + $0x80] sm:$0xff]
        %v312 = vld [vmem:[#allocation2 + $0x88] sm:$0xff]
        %v313 = vld [vmem:[#allocation2 + $0x90] sm:$0xff]
        %v314 = vld [vmem:[#allocation2 + $0x98] sm:$0xff]
        %v315 = vld [vmem:[#allocation2 + $0xa0] sm:$0xff]
        %v316 = vld [vmem:[#allocation2 + $0xa8] sm:$0xff]
        %v317 = vld [vmem:[#allocation2 + $0xb0] sm:$0xff]
        %v318 = vld [vmem:[#allocation2 + $0xb8] sm:$0xff]
        %v319 = vld [vmem:[#allocation2 + $0xc0] sm:$0xff]
        %v320 = vld [vmem:[#allocation2 + $0xc8] sm:$0xff]
        %v321 = vld [vmem:[#allocation2 + $0xd0] sm:$0xff]
        %v322 = vld [vmem:[#allocation2 + $0xd8] sm:$0xff]
        %v323 = vld [vmem:[#allocation2 + $0xe0] sm:$0xff]
        %v324 = vld [vmem:[#allocation2 + $0xe8] sm:$0xff]
        %v325 = vld [vmem:[#allocation2 + $0xf0] sm:$0xff]
        %v326 = vld [vmem:[#allocation2 + $0xf8] sm:$0xff]
        %v327 = vld [vmem:[#allocation2 + $0x100] sm:$0xff]
        %v328 = vld [vmem:[#allocation2 + $0x108] sm:$0xff]
        %v329 = vld [vmem:[#allocation2 + $0x110] sm:$0xff]
        %v330 = vld [vmem:[#allocation2 + $0x118] sm:$0xff]
        %v331 = vld [vmem:[#allocation2 + $0x120] sm:$0xff]
        %v332 = vld [vmem:[#allocation2 + $0x128] sm:$0xff]
        %v333 = vld [vmem:[#allocation2 + $0x130] sm:$0xff]
        %v334 = vld [vmem:[#allocation2 + $0x138] sm:$0xff]
        %v335 = vld [vmem:[#allocation2 + $0x140] sm:$0xff]
        %v336 = vld [vmem:[#allocation2 + $0x148] sm:$0xff]
        %v337 = vld [vmem:[#allocation2 + $0x150] sm:$0xff]
        %v338 = vld [vmem:[#allocation2 + $0x158] sm:$0xff]
        %v339 = vld [vmem:[#allocation2 + $0x160] sm:$0xff]
        %v340 = vld [vmem:[#allocation2 + $0x168] sm:$0xff]
        %v341 = vld [vmem:[#allocation2 + $0x170] sm:$0xff]
        %v342 = vld [vmem:[#allocation2 + $0x178] sm:$0xff]
        %v343 = vld [vmem:[#allocation2 + $0x180] sm:$0xff]
        %v344 = vld [vmem:[#allocation2 + $0x188] sm:$0xff]
        %v345 = vld [vmem:[#allocation2 + $0x190] sm:$0xff]
        %v346 = vld [vmem:[#allocation2 + $0x198] sm:$0xff]
        %v347 = vld [vmem:[#allocation2 + $0x1a0] sm:$0xff]
        %v348 = vld [vmem:[#allocation2 + $0x1a8] sm:$0xff]
        %v349 = vld [vmem:[#allocation2 + $0x1b0] sm:$0xff]
        %v350 = vld [vmem:[#allocation2 + $0x1b8] sm:$0xff]
        %v351 = vld [vmem:[#allocation2 + $0x1c0] sm:$0xff]
        %v352 = vld [vmem:[#allocation2 + $0x1c8] sm:$0xff]
        %v353 = vld [vmem:[#allocation2 + $0x1d0] sm:$0xff]
        %v354 = vld [vmem:[#allocation2 + $0x1d8] sm:$0xff]
        %v355 = vld [vmem:[#allocation2 + $0x1e0] sm:$0xff]
        %v356 = vld [vmem:[#allocation2 + $0x1e8] sm:$0xff]
        %v357 = vld [vmem:[#allocation2 + $0x1f0] sm:$0xff]
        %v358 = vld [vmem:[#allocation2 + $0x1f8] sm:$0xff]
        %v359 = vld [vmem:[#allocation2 + $0x200] sm:$0xff]
        %v360 = vld [vmem:[#allocation2 + $0x208] sm:$0xff]
        %v361 = vld [vmem:[#allocation2 + $0x210] sm:$0xff]
        %v362 = vld [vmem:[#allocation2 + $0x218] sm:$0xff]
        %v363 = vld [vmem:[#allocation2 + $0x220] sm:$0xff]
        %v364 = vld [vmem:[#allocation2 + $0x228] sm:$0xff]
        %v365 = vld [vmem:[#allocation2 + $0x230] sm:$0xff]
        %v366 = vld [vmem:[#allocation2 + $0x238] sm:$0xff]
        %v367 = vld [vmem:[#allocation2 + $0x240] sm:$0xff]
        %v368 = vld [vmem:[#allocation2 + $0x248] sm:$0xff]
        %v369 = vld [vmem:[#allocation2 + $0x250] sm:$0xff]
        %v370 = vld [vmem:[#allocation2 + $0x258] sm:$0xff]
        %v371 = vld [vmem:[#allocation2 + $0x260] sm:$0xff]
        %v372 = vld [vmem:[#allocation2 + $0x268] sm:$0xff]
        %v373 = vld [vmem:[#allocation2 + $0x270] sm:$0xff]
        %v374 = vld [vmem:[#allocation2 + $0x278] sm:$0xff]
        %v375 = vld [vmem:[#allocation2 + $0x280] sm:$0xff]
        %v376 = vld [vmem:[#allocation2 + $0x288] sm:$0xff]
        %v377 = vld [vmem:[#allocation2 + $0x290] sm:$0xff]
        %v378 = vld [vmem:[#allocation2 + $0x298] sm:$0xff]
        %v379 = vld [vmem:[#allocation2 + $0x2a0] sm:$0xff]
        %v380 = vld [vmem:[#allocation2 + $0x2a8] sm:$0xff]
        %v381 = vld [vmem:[#allocation2 + $0x2b0] sm:$0xff]
        %v382 = vld [vmem:[#allocation2 + $0x2b8] sm:$0xff]
        %v383 = vld [vmem:[#allocation2 + $0x2c0] sm:$0xff]
        %v384 = vld [vmem:[#allocation2 + $0x2c8] sm:$0xff]
        %v385 = vld [vmem:[#allocation2 + $0x2d0] sm:$0xff]
        %v386 = vld [vmem:[#allocation2 + $0x2d8] sm:$0xff]
        %v387 = vld [vmem:[#allocation2 + $0x2e0] sm:$0xff]
        %v388 = vld [vmem:[#allocation2 + $0x2e8] sm:$0xff]
        %v389 = vld [vmem:[#allocation2 + $0x2f0] sm:$0xff]
        %v390 = vld [vmem:[#allocation2 + $0x2f8] sm:$0xff]
        %v391 = vld [vmem:[#allocation2 + $0x300] sm:$0xff]
        %v392 = vld [vmem:[#allocation2 + $0x308] sm:$0xff]
        %v393 = vld [vmem:[#allocation2 + $0x310] sm:$0xff]
        %v394 = vld [vmem:[#allocation2 + $0x318] sm:$0xff]
        %v395 = vld [vmem:[#allocation2 + $0x320] sm:$0xff]
        %v396 = vld [vmem:[#allocation2 + $0x328] sm:$0xff]
        %v397 = vld [vmem:[#allocation2 + $0x330] sm:$0xff]
        %v398 = vld [vmem:[#allocation2 + $0x338] sm:$0xff]
        %v399 = vld [vmem:[#allocation2 + $0x340] sm:$0xff]
        %v400 = vld [vmem:[#allocation2 + $0x348] sm:$0xff]
        %v401 = vld [vmem:[#allocation2 + $0x350] sm:$0xff]
        %v402 = vld [vmem:[#allocation2 + $0x358] sm:$0xff]
        %v403 = vld [vmem:[#allocation2 + $0x360] sm:$0xff]
        %v404 = vld [vmem:[#allocation2 + $0x368] sm:$0xff]
        %v405 = vld [vmem:[#allocation2 + $0x370] sm:$0xff]
        %v406 = vld [vmem:[#allocation2 + $0x378] sm:$0xff]
        %v407 = vld [vmem:[#allocation2 + $0x380] sm:$0xff]
        %v408 = vld [vmem:[#allocation2 + $0x388] sm:$0xff]
        %v409 = vld [vmem:[#allocation2 + $0x390] sm:$0xff]
        %v410 = vld [vmem:[#allocation2 + $0x398] sm:$0xff]
        %v411 = vld [vmem:[#allocation2 + $0x3a0] sm:$0xff]
        %v412 = vld [vmem:[#allocation2 + $0x3a8] sm:$0xff]
        %v413 = vld [vmem:[#allocation2 + $0x3b0] sm:$0xff]
        %v414 = vld [vmem:[#allocation2 + $0x3b8] sm:$0xff]
        %v415 = vld [vmem:[#allocation2 + $0x3c0] sm:$0xff]
        %v416 = vld [vmem:[#allocation2 + $0x3c8] sm:$0xff]
        %v417 = vld [vmem:[#allocation2 + $0x3d0] sm:$0xff]
        %v418 = vld [vmem:[#allocation2 + $0x3d8] sm:$0xff]
        %v419 = vld [vmem:[#allocation2 + $0x3e0] sm:$0xff]
        %v420 = vld [vmem:[#allocation2 + $0x3e8] sm:$0xff]
        %v421 = vld [vmem:[#allocation2 + $0x3f0] sm:$0xff]
        %v422 = vld [vmem:[#allocation2 + $0x3f8] sm:$0xff]
        %v423 = vld [vmem:[#allocation2 + $0x400] sm:$0xff]
        %v424 = vld [vmem:[#allocation2 + $0x408] sm:$0xff]
        %v425 = vld [vmem:[#allocation2 + $0x410] sm:$0xff]
        %v426 = vld [vmem:[#allocation2 + $0x418] sm:$0xff]
        %v427 = vld [vmem:[#allocation2 + $0x420] sm:$0xff]
        %v428 = vld [vmem:[#allocation2 + $0x428] sm:$0xff]
        %v429 = vld [vmem:[#allocation2 + $0x430] sm:$0xff]
        %v430 = vld [vmem:[#allocation2 + $0x438] sm:$0xff]
        %v431 = vld [vmem:[#allocation2 + $0x440] sm:$0xff]
        %v432 = vld [vmem:[#allocation2 + $0x448] sm:$0xff]
        %v433 = vld [vmem:[#allocation2 + $0x450] sm:$0xff]
        %v434 = vld [vmem:[#allocation2 + $0x458] sm:$0xff]
        %v435 = vld [vmem:[#allocation2 + $0x460] sm:$0xff]
        %v436 = vld [vmem:[#allocation2 + $0x468] sm:$0xff]
        %v437 = vld [vmem:[#allocation2 + $0x470] sm:$0xff]
        %v438 = vld [vmem:[#allocation2 + $0x478] sm:$0xff]
        %v439 = vld [vmem:[#allocation2 + $0x480] sm:$0xff]
        %v440 = vld [vmem:[#allocation2 + $0x488] sm:$0xff]
        %v441 = vld [vmem:[#allocation2 + $0x490] sm:$0xff]
        %v442 = vld [vmem:[#allocation2 + $0x498] sm:$0xff]
        %v443 = vld [vmem:[#allocation2 + $0x4a0] sm:$0xff]
        %v444 = vld [vmem:[#allocation2 + $0x4a8] sm:$0xff]
        %v445 = vld [vmem:[#allocation2 + $0x4b0] sm:$0xff]
        %v446 = vld [vmem:[#allocation2 + $0x4b8] sm:$0xff]
        %v447 = vld [vmem:[#allocation2 + $0x4c0] sm:$0xff]
        %v448 = vld [vmem:[#allocation2 + $0x4c8] sm:$0xff]
        %v449 = vld [vmem:[#allocation2 + $0x4d0] sm:$0xff]
        %v450 = vld [vmem:[#allocation2 + $0x4d8] sm:$0xff]
        %v451 = vld [vmem:[#allocation2 + $0x4e0] sm:$0xff]
        %v452 = vld [vmem:[#allocation2 + $0x4e8] sm:$0xff]
        %v453 = vld [vmem:[#allocation2 + $0x4f0] sm:$0xff]
        %v454 = vld [vmem:[#allocation2 + $0x4f8] sm:$0xff]
        %v455 = vld [vmem:[%s2] sm:$0x1f]
        %v456 = vld [vmem:[#allocation6] sm:$0xf]
        %v459 = vunpack.c.l.s4 1966171168
        %v460 = vunpack.c.0.s8 %v459
        %v461 = vlaneseq
        %v462 = vshrl.u32 %v461, 7
        %v463 = vsub.s32 %v460, %v462
        %v464 = vrot.slane %v456, %v463
        %v465 = vcombine.high %v464, %v464
        %v467 = vunpack.c.l.s4 1966171168
        %v468 = vunpack.c.0.s8 %v467
        %v469 = vlaneseq
        %v470 = vshrl.u32 %v469, 7
        %v471 = vsub.s32 %v468, %v470
        %v472 = vrot.slane %v464, %v471
        %v474 = vunpack.c.l.s4 1966171168
        %v475 = vunpack.c.0.s8 %v474
        %v476 = vlaneseq
        %v477 = vshrl.u32 %v476, 7
        %v478 = vsub.s32 %v475, %v477
        %v479 = vrot.slane %v465, %v478
        %v480 = vcombine.high %v472, %v472
        %v481 = vcombine.high %v479, %v479
        %486 = vmatprep.subr.bf16.mxu0 %v296
        %487 = vmatpush1.bf16.xpose.msra.mxu0 %v295
        %488 = vmatprep.subr.bf16.mxu0 %v300
        %489 = vmatpush1.bf16.xpose.msra.mxu0 %v299
        %490 = vmatprep.subr.bf16.mxu0 %v304
        %491 = vmatpush1.bf16.xpose.msra.mxu0 %v303
        %492 = vmatprep.subr.bf16.mxu0 %v308
        %493 = vmatpush1.bf16.xpose.msra.mxu0 %v307
        %494 = vmatprep.subr.bf16.mxu0 %v312
        %495 = vmatpush1.bf16.xpose.msra.mxu0 %v311
        %496 = vmatprep.subr.bf16.mxu0 %v316
        %497 = vmatpush1.bf16.xpose.msra.mxu0 %v315
        %498 = vmatprep.subr.bf16.mxu0 %v320
        %499 = vmatpush1.bf16.xpose.msra.mxu0 %v319
        %500 = vmatprep.subr.bf16.mxu0 %v324
        %501 = vmatpush1.bf16.xpose.msra.mxu0 %v323
        %502 = vmatprep.subr.bf16.mxu0 %v328
        %503 = vmatpush1.bf16.xpose.msra.mxu0 %v327
        %504 = vmatprep.subr.bf16.mxu0 %v332
        %505 = vmatpush1.bf16.xpose.msra.mxu0 %v331
        %506 = vmatprep.subr.bf16.mxu0 %v336
        %507 = vmatpush1.bf16.xpose.msra.mxu0 %v335
        %508 = vmatprep.subr.bf16.mxu0 %v340
        %509 = vmatpush1.bf16.xpose.msra.mxu0 %v339
        %510 = vmatprep.subr.bf16.mxu0 %v344
        %511 = vmatpush1.bf16.xpose.msra.mxu0 %v343
        %512 = vmatprep.subr.bf16.mxu0 %v348
        %513 = vmatpush1.bf16.xpose.msra.mxu0 %v347
        %514 = vmatprep.subr.bf16.mxu0 %v352
        %515 = vmatpush1.bf16.xpose.msra.mxu0 %v351
        %516 = vmatprep.subr.bf16.mxu0 %v356
        %517 = vmatpush1.bf16.xpose.msra.mxu0 %v355
        %518 = vmatprep.mubr.bf16.mxu0 %v479
        %519 = vmatmul.mubr.bf16.gmra.mrb[0].mxu0 %v472
        %v520 = vpop.f32.mrb[0].mxu0
        %v521 = vadd.f32 0.0, %v520
        %v522 = vpop.f32.mrb[0].mxu0
        %v523 = vadd.f32 0.0, %v522
        %v524 = vpop.f32.mrb[0].mxu0
        %v525 = vpop.f32.mrb[0].mxu0
        %526 = vdwg.mxu0
        %527 = vmatprep.subr.bf16.mxu0 %v298
        %528 = vmatpush1.bf16.xpose.msra.mxu0 %v297
        %529 = vmatprep.subr.bf16.mxu0 %v302
        %530 = vmatpush1.bf16.xpose.msra.mxu0 %v301
        %531 = vmatprep.subr.bf16.mxu0 %v306
        %532 = vmatpush1.bf16.xpose.msra.mxu0 %v305
        %533 = vmatprep.subr.bf16.mxu0 %v310
        %534 = vmatpush1.bf16.xpose.msra.mxu0 %v309
        %535 = vmatprep.subr.bf16.mxu0 %v314
        %536 = vmatpush1.bf16.xpose.msra.mxu0 %v313
        %537 = vmatprep.subr.bf16.mxu0 %v318
        %538 = vmatpush1.bf16.xpose.msra.mxu0 %v317
        %539 = vmatprep.subr.bf16.mxu0 %v322
        %540 = vmatpush1.bf16.xpose.msra.mxu0 %v321
        %541 = vmatprep.subr.bf16.mxu0 %v326
        %542 = vmatpush1.bf16.xpose.msra.mxu0 %v325
        %543 = vmatprep.subr.bf16.mxu0 %v330
        %544 = vmatpush1.bf16.xpose.msra.mxu0 %v329
        %545 = vmatprep.subr.bf16.mxu0 %v334
        %546 = vmatpush1.bf16.xpose.msra.mxu0 %v333
        %547 = vmatprep.subr.bf16.mxu0 %v338
        %548 = vmatpush1.bf16.xpose.msra.mxu0 %v337
        %549 = vmatprep.subr.bf16.mxu0 %v342
        %550 = vmatpush1.bf16.xpose.msra.mxu0 %v341
        %551 = vmatprep.subr.bf16.mxu0 %v346
        %552 = vmatpush1.bf16.xpose.msra.mxu0 %v345
        %553 = vmatprep.subr.bf16.mxu0 %v350
        %554 = vmatpush1.bf16.xpose.msra.mxu0 %v349
        %555 = vmatprep.subr.bf16.mxu0 %v354
        %556 = vmatpush1.bf16.xpose.msra.mxu0 %v353
        %557 = vmatprep.subr.bf16.mxu0 %v358
        %558 = vmatpush1.bf16.xpose.msra.mxu0 %v357
        %559 = vmatprep.mubr.bf16.mxu0 %v481
        %560 = vmatmul.mubr.bf16.gmra.mrb[0].mxu0 %v480
        %v561 = vpop.f32.mrb[0].mxu0
        %v562 = vadd.f32 %v521, %v561
        %v563 = vpop.f32.mrb[0].mxu0
        %v564 = vadd.f32 %v523, %v563
        %v565 = vpop.f32.mrb[0].mxu0
        %v566 = vpop.f32.mrb[0].mxu0
        %567 = vdwg.mxu0
        %568 = vmatprep.subr.bf16.mxu0 %v360
        %569 = vmatpush1.bf16.xpose.msra.mxu0 %v359
        %570 = vmatprep.subr.bf16.mxu0 %v364
        %571 = vmatpush1.bf16.xpose.msra.mxu0 %v363
        %572 = vmatprep.subr.bf16.mxu0 %v368
        %573 = vmatpush1.bf16.xpose.msra.mxu0 %v367
        %574 = vmatprep.subr.bf16.mxu0 %v372
        %575 = vmatpush1.bf16.xpose.msra.mxu0 %v371
        %576 = vmatprep.subr.bf16.mxu0 %v376
        %577 = vmatpush1.bf16.xpose.msra.mxu0 %v375
        %578 = vmatprep.subr.bf16.mxu0 %v380
        %579 = vmatpush1.bf16.xpose.msra.mxu0 %v379
        %580 = vmatprep.subr.bf16.mxu0 %v384
        %581 = vmatpush1.bf16.xpose.msra.mxu0 %v383
        %582 = vmatprep.subr.bf16.mxu0 %v388
        %583 = vmatpush1.bf16.xpose.msra.mxu0 %v387
        %584 = vmatprep.subr.bf16.mxu0 %v392
        %585 = vmatpush1.bf16.xpose.msra.mxu0 %v391
        %586 = vmatprep.subr.bf16.mxu0 %v396
        %587 = vmatpush1.bf16.xpose.msra.mxu0 %v395
        %588 = vmatprep.subr.bf16.mxu0 %v400
        %589 = vmatpush1.bf16.xpose.msra.mxu0 %v399
        %590 = vmatprep.subr.bf16.mxu0 %v404
        %591 = vmatpush1.bf16.xpose.msra.mxu0 %v403
        %592 = vmatprep.subr.bf16.mxu0 %v408
        %593 = vmatpush1.bf16.xpose.msra.mxu0 %v407
        %594 = vmatprep.subr.bf16.mxu0 %v412
        %595 = vmatpush1.bf16.xpose.msra.mxu0 %v411
        %596 = vmatprep.subr.bf16.mxu0 %v416
        %597 = vmatpush1.bf16.xpose.msra.mxu0 %v415
        %598 = vmatprep.subr.bf16.mxu0 %v420
        %599 = vmatpush1.bf16.xpose.msra.mxu0 %v419
        %600 = vmatprep.mubr.bf16.mxu0 %v479
        %601 = vmatmul.mubr.bf16.gmra.mrb[0].mxu0 %v472
        %v602 = vpop.f32.mrb[0].mxu0
        %v603 = vadd.f32 0.0, %v602
        %v604 = vpop.f32.mrb[0].mxu0
        %v605 = vadd.f32 0.0, %v604
        %v606 = vpop.f32.mrb[0].mxu0
        %v607 = vpop.f32.mrb[0].mxu0
        %608 = vdwg.mxu0
        %609 = vmatprep.subr.bf16.mxu0 %v362
        %610 = vmatpush1.bf16.xpose.msra.mxu0 %v361
        %611 = vmatprep.subr.bf16.mxu0 %v366
        %612 = vmatpush1.bf16.xpose.msra.mxu0 %v365
        %613 = vmatprep.subr.bf16.mxu0 %v370
        %614 = vmatpush1.bf16.xpose.msra.mxu0 %v369
        %615 = vmatprep.subr.bf16.mxu0 %v374
        %616 = vmatpush1.bf16.xpose.msra.mxu0 %v373
        %617 = vmatprep.subr.bf16.mxu0 %v378
        %618 = vmatpush1.bf16.xpose.msra.mxu0 %v377
        %619 = vmatprep.subr.bf16.mxu0 %v382
        %620 = vmatpush1.bf16.xpose.msra.mxu0 %v381
        %621 = vmatprep.subr.bf16.mxu0 %v386
        %622 = vmatpush1.bf16.xpose.msra.mxu0 %v385
        %623 = vmatprep.subr.bf16.mxu0 %v390
        %624 = vmatpush1.bf16.xpose.msra.mxu0 %v389
        %625 = vmatprep.subr.bf16.mxu0 %v394
        %626 = vmatpush1.bf16.xpose.msra.mxu0 %v393
        %627 = vmatprep.subr.bf16.mxu0 %v398
        %628 = vmatpush1.bf16.xpose.msra.mxu0 %v397
        %629 = vmatprep.subr.bf16.mxu0 %v402
        %630 = vmatpush1.bf16.xpose.msra.mxu0 %v401
        %631 = vmatprep.subr.bf16.mxu0 %v406
        %632 = vmatpush1.bf16.xpose.msra.mxu0 %v405
        %633 = vmatprep.subr.bf16.mxu0 %v410
        %634 = vmatpush1.bf16.xpose.msra.mxu0 %v409
        %635 = vmatprep.subr.bf16.mxu0 %v414
        %636 = vmatpush1.bf16.xpose.msra.mxu0 %v413
        %637 = vmatprep.subr.bf16.mxu0 %v418
        %638 = vmatpush1.bf16.xpose.msra.mxu0 %v417
        %639 = vmatprep.subr.bf16.mxu0 %v422
        %640 = vmatpush1.bf16.xpose.msra.mxu0 %v421
        %641 = vmatprep.mubr.bf16.mxu0 %v481
        %642 = vmatmul.mubr.bf16.gmra.mrb[0].mxu0 %v480
        %v643 = vpop.f32.mrb[0].mxu0
        %v644 = vadd.f32 %v603, %v643
        %v645 = vpop.f32.mrb[0].mxu0
        %v646 = vadd.f32 %v605, %v645
        %v647 = vpop.f32.mrb[0].mxu0
        %v648 = vpop.f32.mrb[0].mxu0
        %649 = vdwg.mxu0
        %650 = vmatprep.subr.bf16.mxu0 %v424
        %651 = vmatpush1.bf16.xpose.msra.mxu0 %v423
        %652 = vmatprep.subr.bf16.mxu0 %v428
        %653 = vmatpush1.bf16.xpose.msra.mxu0 %v427
        %654 = vmatprep.subr.bf16.mxu0 %v432
        %655 = vmatpush1.bf16.xpose.msra.mxu0 %v431
        %656 = vmatprep.subr.bf16.mxu0 %v436
        %657 = vmatpush1.bf16.xpose.msra.mxu0 %v435
        %658 = vmatprep.subr.bf16.mxu0 %v440
        %659 = vmatpush1.bf16.xpose.msra.mxu0 %v439
        %660 = vmatprep.subr.bf16.mxu0 %v444
        %661 = vmatpush1.bf16.xpose.msra.mxu0 %v443
        %662 = vmatprep.subr.bf16.mxu0 %v448
        %663 = vmatpush1.bf16.xpose.msra.mxu0 %v447
        %664 = vmatprep.subr.bf16.mxu0 %v452
        %665 = vmatpush1.bf16.xpose.msra.mxu0 %v451
        %666 = vmatprep.subr.bf16.mxu0 0
        %667 = vmatpush1.bf16.xpose.msra.mxu0 0
        %668 = vmatprep.subr.bf16.mxu0 0
        %669 = vmatpush1.bf16.xpose.msra.mxu0 0
        %670 = vmatprep.subr.bf16.mxu0 0
        %671 = vmatpush1.bf16.xpose.msra.mxu0 0
        %672 = vmatprep.subr.bf16.mxu0 0
        %673 = vmatpush1.bf16.xpose.msra.mxu0 0
        %674 = vmatprep.subr.bf16.mxu0 0
        %675 = vmatpush1.bf16.xpose.msra.mxu0 0
        %676 = vmatprep.subr.bf16.mxu0 0
        %677 = vmatpush1.bf16.xpose.msra.mxu0 0
        %678 = vmatprep.subr.bf16.mxu0 0
        %679 = vmatpush1.bf16.xpose.msra.mxu0 0
        %680 = vmatprep.subr.bf16.mxu0 0
        %681 = vmatpush1.bf16.xpose.msra.mxu0 0
        %682 = vmatprep.mubr.bf16.mxu0 %v479
        %683 = vmatmul.mubr.bf16.gmra.mrb[0].mxu0 %v472
        %v684 = vpop.f32.mrb[0].mxu0
        %v685 = vadd.f32 0.0, %v684
        %v686 = vpop.f32.mrb[0].mxu0
        %v687 = vpop.f32.mrb[0].mxu0
        %v688 = vpop.f32.mrb[0].mxu0
        %689 = vdwg.mxu0
        %690 = vmatprep.subr.bf16.mxu0 %v426
        %691 = vmatpush1.bf16.xpose.msra.mxu0 %v425
        %692 = vmatprep.subr.bf16.mxu0 %v430
        %693 = vmatpush1.bf16.xpose.msra.mxu0 %v429
        %694 = vmatprep.subr.bf16.mxu0 %v434
        %695 = vmatpush1.bf16.xpose.msra.mxu0 %v433
        %696 = vmatprep.subr.bf16.mxu0 %v438
        %697 = vmatpush1.bf16.xpose.msra.mxu0 %v437
        %698 = vmatprep.subr.bf16.mxu0 %v442
        %699 = vmatpush1.bf16.xpose.msra.mxu0 %v441
        %700 = vmatprep.subr.bf16.mxu0 %v446
        %701 = vmatpush1.bf16.xpose.msra.mxu0 %v445
        %702 = vmatprep.subr.bf16.mxu0 %v450
        %703 = vmatpush1.bf16.xpose.msra.mxu0 %v449
        %704 = vmatprep.subr.bf16.mxu0 %v454
        %705 = vmatpush1.bf16.xpose.msra.mxu0 %v453
        %706 = vmatprep.subr.bf16.mxu0 0
        %707 = vmatpush1.bf16.xpose.msra.mxu0 0
        %708 = vmatprep.subr.bf16.mxu0 0
        %709 = vmatpush1.bf16.xpose.msra.mxu0 0
        %710 = vmatprep.subr.bf16.mxu0 0
        %711 = vmatpush1.bf16.xpose.msra.mxu0 0
        %712 = vmatprep.subr.bf16.mxu0 0
        %713 = vmatpush1.bf16.xpose.msra.mxu0 0
        %714 = vmatprep.subr.bf16.mxu0 0
        %715 = vmatpush1.bf16.xpose.msra.mxu0 0
        %716 = vmatprep.subr.bf16.mxu0 0
        %717 = vmatpush1.bf16.xpose.msra.mxu0 0
        %718 = vmatprep.subr.bf16.mxu0 0
        %719 = vmatpush1.bf16.xpose.msra.mxu0 0
        %720 = vmatprep.subr.bf16.mxu0 0
        %721 = vmatpush1.bf16.xpose.msra.mxu0 0
        %722 = vmatprep.mubr.bf16.mxu0 %v481
        %723 = vmatmul.mubr.bf16.gmra.mrb[0].mxu0 %v480
        %v724 = vpop.f32.mrb[0].mxu0
        %v725 = vadd.f32 %v685, %v724
        %v726 = vpop.f32.mrb[0].mxu0
        %v727 = vpop.f32.mrb[0].mxu0
        %v728 = vpop.f32.mrb[0].mxu0
        %729 = vdwg.mxu0
        %s730 = scalar_select %p164, 1.0, 0.0
        %v731 = vld [vmem:[%s1] sm:$0x1f]
        %v732 = vstv %s730
        %v733 = vmul.f32 %v732, %v731
        %s734 = smul.f32 %s730, 2.0
        %s735 = ssub.f32 1.0, %s734
        %v736 = vstv %s735
        %v737 = vmul.f32 %v736, %v562
        %v738 = vmul.f32 %v736, %v564
        %v739 = vmul.f32 %v736, %v644
        %v740 = vmul.f32 %v736, %v646
        %v741 = vmul.f32 %v736, %v725
        %v747 = vcombine.low %v737, %v738
        %v748 = vcombine.low %v739, %v740
        %v750 = vunpack.c.l.s4 1966171168
        %v751 = vunpack.c.0.s8 %v750
        %v752 = vlaneseq
        %v753 = vshrl.u32 %v752, 7
        %v754 = vsub.s32 %v751, %v753
        %v755 = vrot.slane %v747, %v754
        %v757 = vunpack.c.l.s4 1966171168
        %v758 = vunpack.c.0.s8 %v757
        %v759 = vlaneseq
        %v760 = vshrl.u32 %v759, 7
        %v761 = vsub.s32 %v758, %v760
        %v762 = vrot.slane %v748, %v761
        %v764 = vunpack.c.l.s4 1966171168
        %v765 = vunpack.c.0.s8 %v764
        %v766 = vlaneseq
        %v767 = vshrl.u32 %v766, 7
        %v768 = vsub.s32 %v765, %v767
        %v769 = vrot.slane %v741, %v768
        %v770 = vcombine.low %v755, %v762
        %v772 = vunpack.c.l.s4 1966171168
        %v773 = vunpack.c.0.s8 %v772
        %v774 = vlaneseq
        %v775 = vshrl.u32 %v774, 7
        %v776 = vsub.s32 %v773, %v775
        %v777 = vrot.slane %v770, %v776
        %v779 = vunpack.c.l.s4 1966171168
        %v780 = vunpack.c.0.s8 %v779
        %v781 = vlaneseq
        %v782 = vshrl.u32 %v781, 7
        %v783 = vsub.s32 %v780, %v782
        %v784 = vrot.slane %v769, %v783
        %v785 = vcombine.low %v777, %v784
        %v787 = vadd.f32 %v733, %v785
        %v788 = vmul.f32 %v455, %v787
        %v790 = vlaneseq
        %v791 = vshrl.u32 %v790, 7
        %v792 = vsub.s32 0, %v791
        %v793 = vrot.slane %v788, %v792
        %v794 = vlaneseq
        %v795 = vshrl.u32 %v794, 7
        %v796 = vsub.s32 1, %v795
        %v797 = vrot.slane %v788, %v796
        %v798 = vlaneseq
        %v799 = vshrl.u32 %v798, 7
        %v800 = vsub.s32 2, %v799
        %v801 = vrot.slane %v788, %v800
        %v802 = vlaneseq
        %v803 = vshrl.u32 %v802, 7
        %v804 = vsub.s32 3, %v803
        %v805 = vrot.slane %v788, %v804
        %v806 = vlaneseq
        %v807 = vshrl.u32 %v806, 7
        %v808 = vsub.s32 4, %v807
        %v809 = vrot.slane %v788, %v808
        %v815 = vpack.c.bf16 %v793, %v793
        %v816 = vpack.c.bf16 %v797, %v797
        %v817 = vpack.c.bf16 %v801, %v801
        %v818 = vpack.c.bf16 %v805, %v805
        %v819 = vpack.c.bf16 %v809, %v809
        %v820 = vld [vmem:[#allocation7] sm:$0xf]
        %821 = vmatprep.subr.bf16.mxu0 %v296
        %822 = vmatpush1.bf16.msra.mxu0 %v295
        %823 = vmatprep.subr.bf16.mxu0 %v300
        %824 = vmatpush1.bf16.msra.mxu0 %v299
        %825 = vmatprep.subr.bf16.mxu0 %v304
        %826 = vmatpush1.bf16.msra.mxu0 %v303
        %827 = vmatprep.subr.bf16.mxu0 %v308
        %828 = vmatpush1.bf16.msra.mxu0 %v307
        %829 = vmatprep.subr.bf16.mxu0 %v312
        %830 = vmatpush1.bf16.msra.mxu0 %v311
        %831 = vmatprep.subr.bf16.mxu0 %v316
        %832 = vmatpush1.bf16.msra.mxu0 %v315
        %833 = vmatprep.subr.bf16.mxu0 %v320
        %834 = vmatpush1.bf16.msra.mxu0 %v319
        %835 = vmatprep.subr.bf16.mxu0 %v324
        %836 = vmatpush1.bf16.msra.mxu0 %v323
        %837 = vmatprep.subr.bf16.mxu0 %v328
        %838 = vmatpush1.bf16.msra.mxu0 %v327
        %839 = vmatprep.subr.bf16.mxu0 %v332
        %840 = vmatpush1.bf16.msra.mxu0 %v331
        %841 = vmatprep.subr.bf16.mxu0 %v336
        %842 = vmatpush1.bf16.msra.mxu0 %v335
        %843 = vmatprep.subr.bf16.mxu0 %v340
        %844 = vmatpush1.bf16.msra.mxu0 %v339
        %845 = vmatprep.subr.bf16.mxu0 %v344
        %846 = vmatpush1.bf16.msra.mxu0 %v343
        %847 = vmatprep.subr.bf16.mxu0 %v348
        %848 = vmatpush1.bf16.msra.mxu0 %v347
        %849 = vmatprep.subr.bf16.mxu0 %v352
        %850 = vmatpush1.bf16.msra.mxu0 %v351
        %851 = vmatprep.subr.bf16.mxu0 %v356
        %852 = vmatpush1.bf16.msra.mxu0 %v355
        %853 = vmatprep.mubr.bf16.mxu0 %v816
        %854 = vmatmul.mubr.bf16.gmra.mrb[0].mxu0 %v815
        %v855 = vpop.f32.mrb[0].mxu0
        %v856 = vadd.f32 0.0, %v855
        %v857 = vpop.f32.mrb[0].mxu0
        %v858 = vadd.f32 0.0, %v857
        %v859 = vpop.f32.mrb[0].mxu0
        %v860 = vpop.f32.mrb[0].mxu0
        %861 = vdwg.mxu0
        %862 = vmatprep.subr.bf16.mxu0 %v360
        %863 = vmatpush1.bf16.msra.mxu0 %v359
        %864 = vmatprep.subr.bf16.mxu0 %v364
        %865 = vmatpush1.bf16.msra.mxu0 %v363
        %866 = vmatprep.subr.bf16.mxu0 %v368
        %867 = vmatpush1.bf16.msra.mxu0 %v367
        %868 = vmatprep.subr.bf16.mxu0 %v372
        %869 = vmatpush1.bf16.msra.mxu0 %v371
        %870 = vmatprep.subr.bf16.mxu0 %v376
        %871 = vmatpush1.bf16.msra.mxu0 %v375
        %872 = vmatprep.subr.bf16.mxu0 %v380
        %873 = vmatpush1.bf16.msra.mxu0 %v379
        %874 = vmatprep.subr.bf16.mxu0 %v384
        %875 = vmatpush1.bf16.msra.mxu0 %v383
        %876 = vmatprep.subr.bf16.mxu0 %v388
        %877 = vmatpush1.bf16.msra.mxu0 %v387
        %878 = vmatprep.subr.bf16.mxu0 %v392
        %879 = vmatpush1.bf16.msra.mxu0 %v391
        %880 = vmatprep.subr.bf16.mxu0 %v396
        %881 = vmatpush1.bf16.msra.mxu0 %v395
        %882 = vmatprep.subr.bf16.mxu0 %v400
        %883 = vmatpush1.bf16.msra.mxu0 %v399
        %884 = vmatprep.subr.bf16.mxu0 %v404
        %885 = vmatpush1.bf16.msra.mxu0 %v403
        %886 = vmatprep.subr.bf16.mxu0 %v408
        %887 = vmatpush1.bf16.msra.mxu0 %v407
        %888 = vmatprep.subr.bf16.mxu0 %v412
        %889 = vmatpush1.bf16.msra.mxu0 %v411
        %890 = vmatprep.subr.bf16.mxu0 %v416
        %891 = vmatpush1.bf16.msra.mxu0 %v415
        %892 = vmatprep.subr.bf16.mxu0 %v420
        %893 = vmatpush1.bf16.msra.mxu0 %v419
        %894 = vmatprep.mubr.bf16.mxu0 %v818
        %895 = vmatmul.mubr.bf16.gmra.mrb[0].mxu0 %v817
        %v896 = vpop.f32.mrb[0].mxu0
        %v897 = vadd.f32 %v856, %v896
        %v898 = vpop.f32.mrb[0].mxu0
        %v899 = vadd.f32 %v858, %v898
        %v900 = vpop.f32.mrb[0].mxu0
        %v901 = vpop.f32.mrb[0].mxu0
        %902 = vdwg.mxu0
        %903 = vmatprep.subr.bf16.mxu0 %v424
        %904 = vmatpush1.bf16.msra.mxu0 %v423
        %905 = vmatprep.subr.bf16.mxu0 %v428
        %906 = vmatpush1.bf16.msra.mxu0 %v427
        %907 = vmatprep.subr.bf16.mxu0 %v432
        %908 = vmatpush1.bf16.msra.mxu0 %v431
        %909 = vmatprep.subr.bf16.mxu0 %v436
        %910 = vmatpush1.bf16.msra.mxu0 %v435
        %911 = vmatprep.subr.bf16.mxu0 %v440
        %912 = vmatpush1.bf16.msra.mxu0 %v439
        %913 = vmatprep.subr.bf16.mxu0 %v444
        %914 = vmatpush1.bf16.msra.mxu0 %v443
        %915 = vmatprep.subr.bf16.mxu0 %v448
        %916 = vmatpush1.bf16.msra.mxu0 %v447
        %917 = vmatprep.subr.bf16.mxu0 %v452
        %918 = vmatpush1.bf16.msra.mxu0 %v451
        %919 = vmatprep.subr.bf16.mxu0 0
        %920 = vmatpush1.bf16.msra.mxu0 0
        %921 = vmatprep.subr.bf16.mxu0 0
        %922 = vmatpush1.bf16.msra.mxu0 0
        %923 = vmatprep.subr.bf16.mxu0 0
        %924 = vmatpush1.bf16.msra.mxu0 0
        %925 = vmatprep.subr.bf16.mxu0 0
        %926 = vmatpush1.bf16.msra.mxu0 0
        %927 = vmatprep.subr.bf16.mxu0 0
        %928 = vmatpush1.bf16.msra.mxu0 0
        %929 = vmatprep.subr.bf16.mxu0 0
        %930 = vmatpush1.bf16.msra.mxu0 0
        %931 = vmatprep.subr.bf16.mxu0 0
        %932 = vmatpush1.bf16.msra.mxu0 0
        %933 = vmatprep.subr.bf16.mxu0 0
        %934 = vmatpush1.bf16.msra.mxu0 0
        %935 = vmatprep.mubr.bf16.mxu0 0
        %936 = vmatmul.mubr.bf16.gmra.mrb[0].mxu0 %v819
        %v937 = vpop.f32.mrb[0].mxu0
        %v938 = vadd.f32 %v897, %v937
        %v939 = vpop.f32.mrb[0].mxu0
        %v940 = vadd.f32 %v899, %v939
        %v941 = vpop.f32.mrb[0].mxu0
        %v942 = vpop.f32.mrb[0].mxu0
        %943 = vdwg.mxu0
        %944 = vmatprep.subr.bf16.mxu0 %v298
        %945 = vmatpush1.bf16.msra.mxu0 %v297
        %946 = vmatprep.subr.bf16.mxu0 %v302
        %947 = vmatpush1.bf16.msra.mxu0 %v301
        %948 = vmatprep.subr.bf16.mxu0 %v306
        %949 = vmatpush1.bf16.msra.mxu0 %v305
        %950 = vmatprep.subr.bf16.mxu0 %v310
        %951 = vmatpush1.bf16.msra.mxu0 %v309
        %952 = vmatprep.subr.bf16.mxu0 %v314
        %953 = vmatpush1.bf16.msra.mxu0 %v313
        %954 = vmatprep.subr.bf16.mxu0 %v318
        %955 = vmatpush1.bf16.msra.mxu0 %v317
        %956 = vmatprep.subr.bf16.mxu0 %v322
        %957 = vmatpush1.bf16.msra.mxu0 %v321
        %958 = vmatprep.subr.bf16.mxu0 %v326
        %959 = vmatpush1.bf16.msra.mxu0 %v325
        %960 = vmatprep.subr.bf16.mxu0 %v330
        %961 = vmatpush1.bf16.msra.mxu0 %v329
        %962 = vmatprep.subr.bf16.mxu0 %v334
        %963 = vmatpush1.bf16.msra.mxu0 %v333
        %964 = vmatprep.subr.bf16.mxu0 %v338
        %965 = vmatpush1.bf16.msra.mxu0 %v337
        %966 = vmatprep.subr.bf16.mxu0 %v342
        %967 = vmatpush1.bf16.msra.mxu0 %v341
        %968 = vmatprep.subr.bf16.mxu0 %v346
        %969 = vmatpush1.bf16.msra.mxu0 %v345
        %970 = vmatprep.subr.bf16.mxu0 %v350
        %971 = vmatpush1.bf16.msra.mxu0 %v349
        %972 = vmatprep.subr.bf16.mxu0 %v354
        %973 = vmatpush1.bf16.msra.mxu0 %v353
        %974 = vmatprep.subr.bf16.mxu0 %v358
        %975 = vmatpush1.bf16.msra.mxu0 %v357
        %976 = vmatprep.mubr.bf16.mxu0 %v816
        %977 = vmatmul.mubr.bf16.gmra.mrb[0].mxu0 %v815
        %v978 = vpop.f32.mrb[0].mxu0
        %v979 = vadd.f32 0.0, %v978
        %v980 = vpop.f32.mrb[0].mxu0
        %v981 = vadd.f32 0.0, %v980
        %v982 = vpop.f32.mrb[0].mxu0
        %v983 = vpop.f32.mrb[0].mxu0
        %984 = vdwg.mxu0
        %985 = vmatprep.subr.bf16.mxu0 %v362
        %986 = vmatpush1.bf16.msra.mxu0 %v361
        %987 = vmatprep.subr.bf16.mxu0 %v366
        %988 = vmatpush1.bf16.msra.mxu0 %v365
        %989 = vmatprep.subr.bf16.mxu0 %v370
        %990 = vmatpush1.bf16.msra.mxu0 %v369
        %991 = vmatprep.subr.bf16.mxu0 %v374
        %992 = vmatpush1.bf16.msra.mxu0 %v373
        %993 = vmatprep.subr.bf16.mxu0 %v378
        %994 = vmatpush1.bf16.msra.mxu0 %v377
        %995 = vmatprep.subr.bf16.mxu0 %v382
        %996 = vmatpush1.bf16.msra.mxu0 %v381
        %997 = vmatprep.subr.bf16.mxu0 %v386
        %998 = vmatpush1.bf16.msra.mxu0 %v385
        %999 = vmatprep.subr.bf16.mxu0 %v390
        %1000 = vmatpush1.bf16.msra.mxu0 %v389
        %1001 = vmatprep.subr.bf16.mxu0 %v394
        %1002 = vmatpush1.bf16.msra.mxu0 %v393
        %1003 = vmatprep.subr.bf16.mxu0 %v398
        %1004 = vmatpush1.bf16.msra.mxu0 %v397
        %1005 = vmatprep.subr.bf16.mxu0 %v402
        %1006 = vmatpush1.bf16.msra.mxu0 %v401
        %1007 = vmatprep.subr.bf16.mxu0 %v406
        %1008 = vmatpush1.bf16.msra.mxu0 %v405
        %1009 = vmatprep.subr.bf16.mxu0 %v410
        %1010 = vmatpush1.bf16.msra.mxu0 %v409
        %1011 = vmatprep.subr.bf16.mxu0 %v414
        %1012 = vmatpush1.bf16.msra.mxu0 %v413
        %1013 = vmatprep.subr.bf16.mxu0 %v418
        %1014 = vmatpush1.bf16.msra.mxu0 %v417
        %1015 = vmatprep.subr.bf16.mxu0 %v422
        %1016 = vmatpush1.bf16.msra.mxu0 %v421
        %1017 = vmatprep.mubr.bf16.mxu0 %v818
        %1018 = vmatmul.mubr.bf16.gmra.mrb[0].mxu0 %v817
        %v1019 = vpop.f32.mrb[0].mxu0
        %v1020 = vadd.f32 %v979, %v1019
        %v1021 = vpop.f32.mrb[0].mxu0
        %v1022 = vadd.f32 %v981, %v1021
        %v1023 = vpop.f32.mrb[0].mxu0
        %v1024 = vpop.f32.mrb[0].mxu0
        %1025 = vdwg.mxu0
        %1026 = vmatprep.subr.bf16.mxu0 %v426
        %1027 = vmatpush1.bf16.msra.mxu0 %v425
        %1028 = vmatprep.subr.bf16.mxu0 %v430
        %1029 = vmatpush1.bf16.msra.mxu0 %v429
        %1030 = vmatprep.subr.bf16.mxu0 %v434
        %1031 = vmatpush1.bf16.msra.mxu0 %v433
        %1032 = vmatprep.subr.bf16.mxu0 %v438
        %1033 = vmatpush1.bf16.msra.mxu0 %v437
        %1034 = vmatprep.subr.bf16.mxu0 %v442
        %1035 = vmatpush1.bf16.msra.mxu0 %v441
        %1036 = vmatprep.subr.bf16.mxu0 %v446
        %1037 = vmatpush1.bf16.msra.mxu0 %v445
        %1038 = vmatprep.subr.bf16.mxu0 %v450
        %1039 = vmatpush1.bf16.msra.mxu0 %v449
        %1040 = vmatprep.subr.bf16.mxu0 %v454
        %1041 = vmatpush1.bf16.msra.mxu0 %v453
        %1042 = vmatprep.subr.bf16.mxu0 0
        %1043 = vmatpush1.bf16.msra.mxu0 0
        %1044 = vmatprep.subr.bf16.mxu0 0
        %1045 = vmatpush1.bf16.msra.mxu0 0
        %1046 = vmatprep.subr.bf16.mxu0 0
        %1047 = vmatpush1.bf16.msra.mxu0 0
        %1048 = vmatprep.subr.bf16.mxu0 0
        %1049 = vmatpush1.bf16.msra.mxu0 0
        %1050 = vmatprep.subr.bf16.mxu0 0
        %1051 = vmatpush1.bf16.msra.mxu0 0
        %1052 = vmatprep.subr.bf16.mxu0 0
        %1053 = vmatpush1.bf16.msra.mxu0 0
        %1054 = vmatprep.subr.bf16.mxu0 0
        %1055 = vmatpush1.bf16.msra.mxu0 0
        %1056 = vmatprep.subr.bf16.mxu0 0
        %1057 = vmatpush1.bf16.msra.mxu0 0
        %1058 = vmatprep.mubr.bf16.mxu0 0
        %1059 = vmatmul.mubr.bf16.gmra.mrb[0].mxu0 %v819
        %v1060 = vpop.f32.mrb[0].mxu0
        %v1061 = vadd.f32 %v1020, %v1060
        %v1062 = vpop.f32.mrb[0].mxu0
        %v1063 = vadd.f32 %v1022, %v1062
        %v1064 = vpop.f32.mrb[0].mxu0
        %v1065 = vpop.f32.mrb[0].mxu0
        %1066 = vdwg.mxu0
        %v1071 = vcombine.low %v938, %v940
        %v1072 = vcombine.low %v1061, %v1063
        %v1074 = vunpack.c.l.s4 1966171168
        %v1075 = vunpack.c.0.s8 %v1074
        %v1076 = vlaneseq
        %v1077 = vshrl.u32 %v1076, 7
        %v1078 = vsub.s32 %v1075, %v1077
        %v1079 = vrot.slane %v1071, %v1078
        %v1081 = vunpack.c.l.s4 1966171168
        %v1082 = vunpack.c.0.s8 %v1081
        %v1083 = vlaneseq
        %v1084 = vshrl.u32 %v1083, 7
        %v1085 = vsub.s32 %v1082, %v1084
        %v1086 = vrot.slane %v1072, %v1085
        %v1087 = vcombine.low %v1079, %v1086
        %v1089 = vunpack.c.l.s4 1966171168
        %v1090 = vunpack.c.0.s8 %v1089
        %v1091 = vlaneseq
        %v1092 = vshrl.u32 %v1091, 7
        %v1093 = vsub.s32 %v1090, %v1092
        %v1094 = vrot.slane %v1087, %v1093
        %v1096 = vadd.f32 %v820, %v1094
        %v1097 = vlaneseq
        %vm1098 = vcmp.ge.s32.totalorder %v1097, 0
        %vm1099 = vcmp.lt.s32.totalorder %v1097, 512
        %vm1100 = vmand %vm1098, %vm1099
        %1101 = vst.msk [vmem:[#allocation7] sm:$0xf] %vm1100, %v1096
        // Predicated region
        $region45: #{tpu_custom_call.1} parent=31 // pred_check
          _
        $region46: #{tpu_custom_call.1} parent=31 // pred_check_branch
          %1103 = sbr.rel (%p166) target = $region48
        $region47: #{tpu_custom_call.1} parent=31 // pred_region
          %v1104 = vld [vmem:[#allocation7] sm:$0xf]
          %1105 = vst.msk [vmem:[#allocation4] sm:$0xf] %vm1100, %v1104
          %1106 = vst.msk [vmem:[#allocation5] sm:$0xf] %vm1100, %v1104
          %v1108 = vlaneseq
          %v1109 = vshrl.u32 %v1108, 7
          %v1110 = vsub.s32 0, %v1109
          %v1111 = vrot.slane %v1104, %v1110
          %v1112 = vlaneseq
          %v1113 = vshrl.u32 %v1112, 7
          %v1114 = vsub.s32 1, %v1113
          %v1115 = vrot.slane %v1104, %v1114
          %v1116 = vlaneseq
          %v1117 = vshrl.u32 %v1116, 7
          %v1118 = vsub.s32 2, %v1117
          %v1119 = vrot.slane %v1104, %v1118
          %v1120 = vlaneseq
          %v1121 = vshrl.u32 %v1120, 7
          %v1122 = vsub.s32 3, %v1121
          %v1123 = vrot.slane %v1104, %v1122
          %v1128 = vpack.c.bf16 %v1111, %v1111
          %v1129 = vpack.c.bf16 %v1115, %v1115
          %v1130 = vpack.c.bf16 %v1119, %v1119
          %v1131 = vpack.c.bf16 %v1123, %v1123
          %v1136 = vcombine.low %v1128, %v1129
          %v1137 = vcombine.low %v1130, %v1131
          %v1139 = vunpack.c.l.s4 1966171168
          %v1140 = vunpack.c.0.s8 %v1139
          %v1141 = vlaneseq
          %v1142 = vshrl.u32 %v1141, 7
          %v1143 = vsub.s32 %v1140, %v1142
          %v1144 = vrot.slane %v1136, %v1143
          %v1146 = vunpack.c.l.s4 1966171168
          %v1147 = vunpack.c.0.s8 %v1146
          %v1148 = vlaneseq
          %v1149 = vshrl.u32 %v1148, 7
          %v1150 = vsub.s32 %v1147, %v1149
          %v1151 = vrot.slane %v1137, %v1150
          %v1152 = vcombine.low %v1144, %v1151
          %v1154 = vunpack.c.l.s4 1966171168
          %v1155 = vunpack.c.0.s8 %v1154
          %v1156 = vlaneseq
          %v1157 = vshrl.u32 %v1156, 7
          %v1158 = vsub.s32 %v1155, %v1157
          %v1159 = vrot.slane %v1152, %v1158
          %vm1161 = vcmask 1040384
          %vm1162 = vsmask.f32 256
          %vm1163 = vmand %vm1161, %vm1162
          %vm1164 = vcmask 1041409
          %vm1165 = vsmask.f32 1280
          %vm1166 = vmand %vm1164, %vm1165
          %vm1167 = vmor %vm1166, %vm1163
          %vm1168 = vcmask 1042434
          %vm1169 = vsmask.f32 2304
          %vm1170 = vmand %vm1168, %vm1169
          %vm1171 = vmor %vm1170, %vm1167
          %vm1172 = vcmask 1043459
          %vm1173 = vsmask.f32 3328
          %vm1174 = vmand %vm1172, %vm1173
          %vm1175 = vmor %vm1174, %vm1171
          %v1176 = vld [vmem:[#allocation6] sm:$0xf]
          %v1177 = vsel %vm1175, %v1159, %v1176
          %1178 = vst [vmem:[#allocation6] sm:$0xf] %v1177
          %v1179 = vmul.f32 %v1104, %v1104
          %v1181 = vlaneseq
          %v1182 = vshrl.u32 %v1181, 7
          %v1183 = vsub.s32 0, %v1182
          %v1184 = vrot.slane %v1179, %v1183
          %v1185 = vlaneseq
          %v1186 = vshrl.u32 %v1185, 7
          %v1187 = vsub.s32 1, %v1186
          %v1188 = vrot.slane %v1179, %v1187
          %v1189 = vlaneseq
          %v1190 = vshrl.u32 %v1189, 7
          %v1191 = vsub.s32 2, %v1190
          %v1192 = vrot.slane %v1179, %v1191
          %v1193 = vlaneseq
          %v1194 = vshrl.u32 %v1193, 7
          %v1195 = vsub.s32 3, %v1194
          %v1196 = vrot.slane %v1179, %v1195
          %vm1201 = vcmask 1040384
          %v1202 = vsel %vm1201, %v1184, 0.0
          %v1203 = vsel %vm1201, %v1188, 0.0
          %v1204 = vadd.f32 %v1202, %v1203
          %v1205 = vsel %vm1201, %v1192, 0.0
          %v1206 = vadd.f32 %v1204, %v1205
          %v1207 = vsel %vm1201, %v1196, 0.0
          %v1208 = vadd.f32 %v1206, %v1207
          %1209 = vadd.xlane.f32.xlu0 %v1208
          %v1210 = vpop.xlane.xlu0 %1209
          %v1211 = vrot.slane %v1210, 4
          %v1212 = vadd.f32 %v1210, %v1211
          %v1213 = vrot.slane %v1212, 2
          %v1214 = vadd.f32 %v1212, %v1213
          %v1215 = vrot.slane %v1214, 1
          %v1216 = vadd.f32 %v1214, %v1215
          %s1217 = vtos %v1216
          %v1218 = vstv %s1217
          %vm1219 = vcmask 0
          %1220 = vst.msk [vmem:[#allocation8] sm:$0x1] %vm1219, %v1218
        $region48: #{tpu_custom_call.1} parent=31 // pred_fallthru
          _
        %p1221 = scmp.gt.s32.totalorder %s21, 0
        %p1222 = pnand %p1221, %p165
        %p1223 = pneg %p1222
        // Predicated region
        $region49: #{tpu_custom_call.1} parent=31 // pred_check
          _
        $region50: #{tpu_custom_call.1} parent=31 // pred_check_branch
          %1225 = sbr.rel (%p1222) target = $region52
        $region51: #{tpu_custom_call.1} parent=31 // pred_region
          %v1226 = vld [vmem:[#allocation8] sm:$0x1]
          %v1227 = vld [vmem:[#allocation5] sm:$0xf]
          %v1228 = vld [vmem:[#allocation7] sm:$0xf]
          %vm1229 = vcmp.gt.f32.partialorder %v1226, 0.0
          %v1230 = vmul.f32 %v1227, %v1228
          %v1232 = vlaneseq
          %v1233 = vshrl.u32 %v1232, 7
          %v1234 = vsub.s32 0, %v1233
          %v1235 = vrot.slane %v1230, %v1234
          %v1236 = vlaneseq
          %v1237 = vshrl.u32 %v1236, 7
          %v1238 = vsub.s32 1, %v1237
          %v1239 = vrot.slane %v1230, %v1238
          %v1240 = vlaneseq
          %v1241 = vshrl.u32 %v1240, 7
          %v1242 = vsub.s32 2, %v1241
          %v1243 = vrot.slane %v1230, %v1242
          %v1244 = vlaneseq
          %v1245 = vshrl.u32 %v1244, 7
          %v1246 = vsub.s32 3, %v1245
          %v1247 = vrot.slane %v1230, %v1246
          %vm1252 = vcmask 1040384
          %v1253 = vsel %vm1252, %v1235, 0.0
          %v1254 = vsel %vm1252, %v1239, 0.0
          %v1255 = vadd.f32 %v1253, %v1254
          %v1256 = vsel %vm1252, %v1243, 0.0
          %v1257 = vadd.f32 %v1255, %v1256
          %v1258 = vsel %vm1252, %v1247, 0.0
          %v1259 = vadd.f32 %v1257, %v1258
          %1260 = vadd.xlane.f32.xlu0 %v1259
          %v1261 = vpop.xlane.xlu0 %1260
          %v1262 = vrot.slane %v1261, 4
          %v1263 = vadd.f32 %v1261, %v1262
          %v1264 = vrot.slane %v1263, 2
          %v1265 = vadd.f32 %v1263, %v1264
          %v1266 = vrot.slane %v1265, 1
          %v1267 = vadd.f32 %v1265, %v1266
          %s1268 = vtos %v1267
          %v1269 = vstv %s1268
          %vm1270 = vcmp.ne.f32.partialorder %v1269, 0.0
          %vm1271 = vmand %vm1229, %vm1270
          %v1272 = vrcp.pop %v1269
          %v1273 = vmul.f32 %v1226, %v1272
          %v1274 = vsel %vm1271, %v1273, 0.0
          %v1275 = vld [vmem:[#allocation12] sm:$0xf]
          %1277 = vset.pattern.permute.xlu0 0
          %1278 = vperm.xlu0 %1277, %v1274
          %v1279 = vpop.permute.xlu0 %1278
          %v1281 = vlaneseq
          %v1282 = vshrl.u32 %v1281, 7
          %v1283 = vsub.s32 0, %v1282
          %v1284 = vrot.slane %v1279, %v1283
          %v1285 = vmul.f32 %v1284, %v1227
          %v1286 = vadd.f32 %v1275, %v1285
          %v1287 = vld [vmem:[#allocation4] sm:$0xf]
          %v1288 = vmul.f32 %v1284, %v1228
          %v1289 = vsub.f32 %v1287, %v1288
          %v1290 = vmul.f32 %v1289, %v1289
          %v1292 = vlaneseq
          %v1293 = vshrl.u32 %v1292, 7
          %v1294 = vsub.s32 0, %v1293
          %v1295 = vrot.slane %v1290, %v1294
          %v1296 = vlaneseq
          %v1297 = vshrl.u32 %v1296, 7
          %v1298 = vsub.s32 1, %v1297
          %v1299 = vrot.slane %v1290, %v1298
          %v1300 = vlaneseq
          %v1301 = vshrl.u32 %v1300, 7
          %v1302 = vsub.s32 2, %v1301
          %v1303 = vrot.slane %v1290, %v1302
          %v1304 = vlaneseq
          %v1305 = vshrl.u32 %v1304, 7
          %v1306 = vsub.s32 3, %v1305
          %v1307 = vrot.slane %v1290, %v1306
          %v1312 = vsel %vm1252, %v1295, 0.0
          %v1313 = vsel %vm1252, %v1299, 0.0
          %v1314 = vadd.f32 %v1312, %v1313
          %v1315 = vsel %vm1252, %v1303, 0.0
          %v1316 = vadd.f32 %v1314, %v1315
          %v1317 = vsel %vm1252, %v1307, 0.0
          %v1318 = vadd.f32 %v1316, %v1317
          %1319 = vadd.xlane.f32.xlu0 %v1318
          %v1320 = vpop.xlane.xlu0 %1319
          %v1321 = vrot.slane %v1320, 4
          %v1322 = vadd.f32 %v1320, %v1321
          %v1323 = vrot.slane %v1322, 2
          %v1324 = vadd.f32 %v1322, %v1323
          %v1325 = vrot.slane %v1324, 1
          %v1326 = vadd.f32 %v1324, %v1325
          %s1327 = vtos %v1326
          %v1328 = vstv %s1327
          %vm1329 = vcmp.gt.f32.partialorder %v1328, 0.0
          %vm1330 = vmand %vm1229, %vm1329
          %vm1331 = vcmp.ne.f32.partialorder %v1226, 0.0
          %vm1332 = vmand %vm1330, %vm1331
          %v1333 = vrcp.pop %v1226
          %v1334 = vmul.f32 %v1328, %v1333
          %v1335 = vsel %vm1332, %v1334, 0.0
          %1337 = vset.pattern.permute.xlu0 0
          %1338 = vperm.xlu0 %1337, %v1335
          %v1339 = vpop.permute.xlu0 %1338
          %v1341 = vlaneseq
          %v1342 = vshrl.u32 %v1341, 7
          %v1343 = vsub.s32 0, %v1342
          %v1344 = vrot.slane %v1339, %v1343
          %v1345 = vmul.f32 %v1344, %v1227
          %v1346 = vadd.f32 %v1289, %v1345
          %v1347 = vsel %vm1330, 1, 0
          %1348 = vset.pattern.permute.xlu0 0
          %1349 = vperm.xlu0 %1348, %v1347
          %v1350 = vpop.permute.xlu0 %1349
          %v1351 = vlaneseq
          %v1352 = vshrl.u32 %v1351, 7
          %v1353 = vsub.s32 0, %v1352
          %v1354 = vrot.slane %v1350, %v1353
          %vm1355 = vcmp.eq.s32.totalorder %v1354, 1
          %v1356 = vsel %vm1355, %v1346, %v1227
          %1357 = vst.msk [vmem:[#allocation12] sm:$0xf] %vm1100, %v1286
          %1358 = vst.msk [vmem:[#allocation4] sm:$0xf] %vm1100, %v1289
          %1359 = vst.msk [vmem:[#allocation5] sm:$0xf] %vm1100, %v1356
          %v1361 = vlaneseq
          %v1362 = vshrl.u32 %v1361, 7
          %v1363 = vsub.s32 0, %v1362
          %v1364 = vrot.slane %v1356, %v1363
          %v1365 = vlaneseq
          %v1366 = vshrl.u32 %v1365, 7
          %v1367 = vsub.s32 1, %v1366
          %v1368 = vrot.slane %v1356, %v1367
          %v1369 = vlaneseq
          %v1370 = vshrl.u32 %v1369, 7
          %v1371 = vsub.s32 2, %v1370
          %v1372 = vrot.slane %v1356, %v1371
          %v1373 = vlaneseq
          %v1374 = vshrl.u32 %v1373, 7
          %v1375 = vsub.s32 3, %v1374
          %v1376 = vrot.slane %v1356, %v1375
          %v1381 = vpack.c.bf16 %v1364, %v1364
          %v1382 = vpack.c.bf16 %v1368, %v1368
          %v1383 = vpack.c.bf16 %v1372, %v1372
          %v1384 = vpack.c.bf16 %v1376, %v1376
          %v1389 = vcombine.low %v1381, %v1382
          %v1390 = vcombine.low %v1383, %v1384
          %v1392 = vunpack.c.l.s4 1966171168
          %v1393 = vunpack.c.0.s8 %v1392
          %v1394 = vlaneseq
          %v1395 = vshrl.u32 %v1394, 7
          %v1396 = vsub.s32 %v1393, %v1395
          %v1397 = vrot.slane %v1389, %v1396
          %v1399 = vunpack.c.l.s4 1966171168
          %v1400 = vunpack.c.0.s8 %v1399
          %v1401 = vlaneseq
          %v1402 = vshrl.u32 %v1401, 7
          %v1403 = vsub.s32 %v1400, %v1402
          %v1404 = vrot.slane %v1390, %v1403
          %v1405 = vcombine.low %v1397, %v1404
          %v1407 = vunpack.c.l.s4 1966171168
          %v1408 = vunpack.c.0.s8 %v1407
          %v1409 = vlaneseq
          %v1410 = vshrl.u32 %v1409, 7
          %v1411 = vsub.s32 %v1408, %v1410
          %v1412 = vrot.slane %v1405, %v1411
          %vm1414 = vcmask 1040384
          %vm1415 = vsmask.f32 256
          %vm1416 = vmand %vm1414, %vm1415
          %vm1417 = vcmask 1041409
          %vm1418 = vsmask.f32 1280
          %vm1419 = vmand %vm1417, %vm1418
          %vm1420 = vmor %vm1419, %vm1416
          %vm1421 = vcmask 1042434
          %vm1422 = vsmask.f32 2304
          %vm1423 = vmand %vm1421, %vm1422
          %vm1424 = vmor %vm1423, %vm1420
          %vm1425 = vcmask 1043459
          %vm1426 = vsmask.f32 3328
          %vm1427 = vmand %vm1425, %vm1426
          %vm1428 = vmor %vm1427, %vm1424
          %v1429 = vld [vmem:[#allocation6] sm:$0xf]
          %v1430 = vsel %vm1428, %v1412, %v1429
          %1431 = vst [vmem:[#allocation6] sm:$0xf] %v1430
          %v1432 = vsel %vm1229, %v1328, %v1226
          %vm1433 = vcmask 0
          %1434 = vst.msk [vmem:[#allocation8] sm:$0x1] %vm1433, %v1432
        $region52: #{tpu_custom_call.1} parent=31 // pred_fallthru
          _
        %p1435 = scmp.eq.s32.totalorder %s21, 10
        %p1436 = pnand %p1435, %p165
        %p1437 = pneg %p1436
        // Predicated region
        $region53: #{tpu_custom_call.1} parent=31 // pred_check
          _
        $region54: #{tpu_custom_call.1} parent=31 // pred_check_branch
          %1439 = sbr.rel (%p1436) target = $region56
        $region55: #{tpu_custom_call.1} parent=31 // pred_region
          %v1440 = vld [vmem:[#allocation12] sm:$0xf]
          %v1441 = vmax.f32 %v1440, 0.0
          %1442 = vst.msk [vmem:[#allocation12] sm:$0xf] %vm1100, %v1441
        $region56: #{tpu_custom_call.1} parent=31 // pred_fallthru
          _
        // Predicated region
        $region57: #{tpu_custom_call.1} parent=31 // pred_check
          %p1443 = pneg %p105
        $region58: #{tpu_custom_call.1} parent=31 // pred_check_branch
          %1445 = sbr.rel (%p1443) target = $region60
        $region59: #{tpu_custom_call.1} parent=31 // pred_region
          %s1447 = ssub.s32 64, 64
          %1448 = vsyncadd [#allocation11], %s1447
          %s1450 = sshll.u32 [#allocation12], 4
          %s1451 = int_to_ptr.vmem [resolvable:$true] %s1450
          %1453 = dma.vmem_to_hbm [thread:$0]  %s1451, 64, %s4, [#allocation11]
        $region60: #{tpu_custom_call.1} parent=31 // pred_fallthru
          _
        // Predicated region
        $region61: #{tpu_custom_call.1} parent=31 // pred_check
          %p1454 = pneg %p105
        $region62: #{tpu_custom_call.1} parent=31 // pred_check_branch
          %1456 = sbr.rel (%p1454) target = $region64
        $region63: #{tpu_custom_call.1} parent=31 // pred_region
          %1457 = dma.done [#allocation11], 64
        $region64: #{tpu_custom_call.1} parent=31 // pred_fallthru
          _
      $region32: #{tpu_custom_call.1} parent=5 // pred_fallthru
        _
      %p1458 = scmp.le.s32.totalorder 2, %s12
      // Predicated region
      $region65: #{tpu_custom_call.1} parent=5 // pred_check
        %p1459 = pneg %p1458
      $region66: #{tpu_custom_call.1} parent=5 // pred_check_branch
        %1461 = sbr.rel (%p1459) target = $region68
      $region67: #{tpu_custom_call.1} parent=5 // pred_region
        %s1462 = ssub.s32 %s12, 2
      $region68: #{tpu_custom_call.1} parent=5 // pred_fallthru
        _
    $region6: #{tpu_custom_call.1} parent=1 // loop_footer
      %s16 = sadd.s32 1, %s12
    $region7: #{tpu_custom_call.1} parent=1 // loop_footer_branch
      %11 = sbr.rel target = $region3
    $region8: #{tpu_custom_call.1} parent=1 // loop_exit
      _
    %1463 = vsyncpa [#allocation10], 1
    %s1464 = scalar_lea.sflag [#allocation10], 1
    %1465 = vsyncpa %s1464, 1
    %1466 = vsyncpa [#allocation11], 1
    %s1467 = scalar_lea.sflag [#allocation11], 1
    %1468 = vsyncpa %s1467, 1
  %1469 = vsyncmov [#allocation3]
  %s1470 = vpop.sfrf %1469
  %p1471 = scmp.eq.s32.totalorder %s1470, 0
  %p1472 = pneg %p1471
  %1474 = shalt.err (%p1472)

</llo_original>
